<compile_context>
chip_gen: v5e
topology: v5e:2x2
jax: 0.10.0
libtpu: 0.0.40
codegen_flags: <defaults>
</compile_context>

<pallas_src>
import jax
import jax.numpy as jnp
from jax.experimental import pallas as pl
from jax.experimental.pallas import tpu as pltpu

HIDDEN = 128        # lane-dense width every hidden/output activation is padded to
NUM_ACTIONS = 10    # true Qnet head width


def _cdiv(a, b):
    return -(-a // b)


def _round_up(n, m):
    return _cdiv(n, m) * m


def _pad2d(arr, rows, cols):
    r, c = arr.shape
    return jnp.pad(arr, ((0, rows - r), (0, cols - c)))


def _num_tensorcores():
    """Best-effort TensorCore count of the local device (v7x has 2)."""
    try:
        dev = jax.devices()[0]
        n = getattr(dev, "num_cores", None)
        if isinstance(n, int) and n > 0:
            return n
        kind = str(getattr(dev, "device_kind", "")).lower()
        if "v7" in kind:
            return 2
    except Exception:
        pass
    return 1


def _choose_tiling(B, batch_tile):
    """Balanced batch tiles: minimal padding, few grid steps, v7x-aware."""
    ncores = _num_tensorcores()
    nt = _cdiv(B, batch_tile)
    # Dual-TC chips: make the tile count a multiple of the core count so the
    # "parallel" grid axis actually gives every TensorCore work.
    if ncores > 1 and nt % ncores != 0 and B >= ncores * 8:
        nt = _cdiv(nt, ncores) * ncores
    bt = _round_up(_cdiv(B, nt), 8)      # sublane-aligned, <=7 padded rows/tile
    return bt, nt * bt


def prepare_params(params):
    """One-time packing: bf16 weight slab + f32 bias block (device-resident).

    Zero-padded weight columns/rows and zero biases keep the real logits
    exact: padded activation columns are ReLU(0)=0 and padded weight rows
    multiply those zeros.
    """
    in_dim = params["w1"].shape[0]
    in_rows = _round_up(in_dim, 16)      # bf16 sublane packing -> 16-aligned offsets
    w1 = _pad2d(params["w1"], in_rows, HIDDEN)
    w2 = _pad2d(params["w2"], HIDDEN, HIDDEN)
    w3 = _pad2d(params["w3"], HIDDEN, HIDDEN)
    w4 = _pad2d(params["w4"], HIDDEN, HIDDEN)
    w5 = _pad2d(params["w5"], HIDDEN, HIDDEN)
    slab = jnp.concatenate([w1, w2, w3, w4, w5], axis=0).astype(jnp.bfloat16)

    bias = jnp.zeros((8, HIDDEN), jnp.float32)
    for i in range(5):
        b = params[f"b{i + 1}"].reshape(-1)
        bias = bias.at[i, : b.shape[0]].set(b)

    return {"slab": slab, "bias": bias}


def qnet_forward(x, prepared, *, batch_tile=1024):
    """x: (B, input_size) float32.  prepared: output of prepare_params()."""
    B, in_dim = x.shape
    slab = prepared["slab"]
    bias = prepared["bias"]

    in_rows = _round_up(in_dim, 16)
    assert slab.shape == (in_rows + 4 * HIDDEN, HIDDEN), "slab/in_dim mismatch"
    # Static slab row offsets of w1..w5 (all 16-aligned).
    offs = (0, in_rows, in_rows + HIDDEN, in_rows + 2 * HIDDEN, in_rows + 3 * HIDDEN)

    bt, B_pad = _choose_tiling(B, batch_tile)
    if B_pad != B:
        x = jnp.pad(x, ((0, B_pad - B), (0, 0)))
    grid = (B_pad // bt,)

    def kernel(x_ref, w_ref, b_ref, o_ref):
        # Fully fused 5-layer MLP on one batch tile.  Weights are resident in
        # VMEM (constant index_map); every width is 128 -> lane-dense vregs
        # and an unmasked output store.  bf16 operands, f32 accumulation.
        b = b_ref[...]
        h = x_ref[...].astype(jnp.bfloat16)
        h = jnp.dot(h, w_ref[pl.ds(offs[0], in_dim), :],
                    preferred_element_type=jnp.float32)
        h = jnp.maximum(h + b[0:1, :], 0.0).astype(jnp.bfloat16)
        h = jnp.dot(h, w_ref[pl.ds(offs[1], HIDDEN), :],
                    preferred_element_type=jnp.float32)
        h = jnp.maximum(h + b[1:2, :], 0.0).astype(jnp.bfloat16)
        h = jnp.dot(h, w_ref[pl.ds(offs[2], HIDDEN), :],
                    preferred_element_type=jnp.float32)
        h = jnp.maximum(h + b[2:3, :], 0.0).astype(jnp.bfloat16)
        h = jnp.dot(h, w_ref[pl.ds(offs[3], HIDDEN), :],
                    preferred_element_type=jnp.float32)
        h = jnp.maximum(h + b[3:4, :], 0.0).astype(jnp.bfloat16)
        out = jnp.dot(h, w_ref[pl.ds(offs[4], HIDDEN), :],
                      preferred_element_type=jnp.float32) + b[4:5, :]
        o_ref[...] = out.astype(o_ref.dtype)

    def resident(arr):
        # Full-extent block, constant index_map: stays in VMEM across the
        # whole batch-parallel grid.
        return pl.BlockSpec(arr.shape, lambda i: (0, 0))

    cost = pl.CostEstimate(
        flops=2 * B_pad * (in_dim * HIDDEN + 4 * HIDDEN * HIDDEN),
        transcendentals=0,
        bytes_accessed=4 * B_pad * (in_dim + HIDDEN)
        + 2 * int(slab.size) + 4 * int(bias.size),
    )

    out = pl.pallas_call(
        kernel,
        out_shape=jax.ShapeDtypeStruct((B_pad, HIDDEN), jnp.float32),
        grid_spec=pltpu.PrefetchScalarGridSpec(
            num_scalar_prefetch=0,
            grid=grid,
            in_specs=[
                pl.BlockSpec((bt, in_dim), lambda i: (i, 0)),
                resident(slab),
                resident(bias),
            ],
            out_specs=pl.BlockSpec((bt, HIDDEN), lambda i: (i, 0)),
        ),
        compiler_params=pltpu.CompilerParams(
            dimension_semantics=("parallel",)),
        cost_estimate=cost,
    )(x, slab, bias)

    # Strip batch padding and zero-padded logit columns (fuses under jit).
    return out[:B, :NUM_ACTIONS]


def init_params(key, input_size):
    """Deterministic init mimicking PyTorch nn.Linear default U[-1/sqrt(fan_in), +]."""
    sizes = [(input_size, 128), (128, 128), (128, 64), (64, 32), (32, 10)]
    params = {}
    for idx, (fan_in, fan_out) in enumerate(sizes, start=1):
        key, kw, kb = jax.random.split(key, 3)
        bound = 1.0 / jnp.sqrt(jnp.float32(fan_in))
        params[f"w{idx}"] = jax.random.uniform(
            kw, (fan_in, fan_out), jnp.float32, -bound, bound)
        params[f"b{idx}"] = jax.random.uniform(
            kb, (1, fan_out), jnp.float32, -bound, bound)
    return params


def qnet_reference(x, params):
    h = x
    for i in range(1, 5):
        h = jnp.maximum(h @ params[f"w{i}"] + params[f"b{i}"], 0.0)
    return h @ params["w5"] + params["b5"]


# TODO(synk): sample_action (host-side python RNG + argmax epsilon-greedy
# policy) is control logic, not a tensor op; it stays outside the kernel.

if __name__ == "__main__":
    key = jax.random.PRNGKey(0)
    input_size = 32
    batch = 512

    key, kx, kp = jax.random.split(key, 3)
    x = jax.random.normal(kx, (batch, input_size), jnp.float32)
    params = init_params(kp, input_size)

    prepared = prepare_params(params)            # one-time padding / packing
    fwd = jax.jit(qnet_forward)                  # slice + pad fuse into the jit

    out = jax.block_until_ready(fwd(x, prepared))
    ref = qnet_reference(x, params)
    assert out.shape == (batch, NUM_ACTIONS)
    # bf16 MXU operands (f32 accumulation) -> small drift vs the f32 reference.
    assert jnp.allclose(out, ref, atol=3e-2, rtol=3e-2), "mismatch vs JAX reference"

    # Ragged / tiny batch path (single tile padded to the next sublane multiple).
    out_small = jax.block_until_ready(fwd(x[:5], prepared))
    assert out_small.shape == (5, NUM_ACTIONS)
    assert jnp.allclose(out_small, ref[:5], atol=3e-2, rtol=3e-2), "ragged-batch mismatch"

    print("KERNEL_OK")
</pallas_src>

<mosaic_0001>
module attributes {stable_mosaic.version = 11 : i64} {
  func.func @kernel(%arg0: i32, %arg1: memref<512x32xf32, #tpu.memory_space<vmem>>, %arg2: memref<544x128xbf16, #tpu.memory_space<vmem>>, %arg3: memref<8x128xf32, #tpu.memory_space<vmem>>, %arg4: memref<512x128xf32, #tpu.memory_space<vmem>>) attributes {dimension_semantics = [#tpu.dimension_semantics<parallel>], iteration_bounds = array<i64: 1>, scalar_prefetch = 0 : i64, scratch_operands = 0 : i64, tpu.core_type = #tpu.core_type<tc>, window_params = [{transform_indices = @transform_0, window_bounds = array<i64: 512, 32>}, {pipeline_mode = #tpu.pipeline_mode<synchronous>, transform_indices = @transform_1, window_bounds = array<i64: 544, 128>}, {pipeline_mode = #tpu.pipeline_mode<synchronous>, transform_indices = @transform_2, window_bounds = array<i64: 8, 128>}, {transform_indices = @transform_3, window_bounds = array<i64: 512, 128>}]} {
    %c0 = arith.constant 0 : index
    %c0_0 = arith.constant 0 : index
    %0 = vector.load %arg3[%c0, %c0_0] : memref<8x128xf32, #tpu.memory_space<vmem>>, vector<8x128xf32>
    %c0_1 = arith.constant 0 : index
    %c0_2 = arith.constant 0 : index
    %1 = vector.load %arg1[%c0_1, %c0_2] : memref<512x32xf32, #tpu.memory_space<vmem>>, vector<512x32xf32>
    %2 = arith.truncf %1 : vector<512x32xf32> to vector<512x32xbf16>
    %c0_3 = arith.constant 0 : index
    %c0_4 = arith.constant 0 : index
    %3 = vector.load %arg2[%c0_3, %c0_4] : memref<544x128xbf16, #tpu.memory_space<vmem>>, vector<32x128xbf16>
    %cst = arith.constant dense<0.000000e+00> : vector<512x128xf32>
    %4 = tpu.matmul %2, %3, %cst {dimension_numbers = #tpu.dot_dimension_numbers<[1], [0], [0], [1], [0, 0, 1, 1], [], []>} : vector<512x32xbf16>, vector<32x128xbf16>, vector<512x128xf32> -> vector<512x128xf32>
    %5 = vector.extract_strided_slice %0 {offsets = [0, 0], sizes = [1, 128], strides = [1, 1]} : vector<8x128xf32> to vector<1x128xf32>
    %6 = vector.broadcast %5 : vector<1x128xf32> to vector<512x128xf32>
    %7 = arith.addf %4, %6 : vector<512x128xf32>
    %cst_5 = arith.constant 0.000000e+00 : f32
    %8 = vector.broadcast %cst_5 : f32 to vector<512x128xf32>
    %9 = arith.maximumf %7, %8 : vector<512x128xf32>
    %10 = arith.truncf %9 : vector<512x128xf32> to vector<512x128xbf16>
    %c32 = arith.constant 32 : index
    %c0_6 = arith.constant 0 : index
    %11 = vector.load %arg2[%c32, %c0_6] : memref<544x128xbf16, #tpu.memory_space<vmem>>, vector<128x128xbf16>
    %cst_7 = arith.constant dense<0.000000e+00> : vector<512x128xf32>
    %12 = tpu.matmul %10, %11, %cst_7 {dimension_numbers = #tpu.dot_dimension_numbers<[1], [0], [0], [1], [0, 0, 1, 1], [], []>} : vector<512x128xbf16>, vector<128x128xbf16>, vector<512x128xf32> -> vector<512x128xf32>
    %13 = vector.extract_strided_slice %0 {offsets = [1, 0], sizes = [1, 128], strides = [1, 1]} : vector<8x128xf32> to vector<1x128xf32>
    %14 = vector.broadcast %13 : vector<1x128xf32> to vector<512x128xf32>
    %15 = arith.addf %12, %14 : vector<512x128xf32>
    %cst_8 = arith.constant 0.000000e+00 : f32
    %16 = vector.broadcast %cst_8 : f32 to vector<512x128xf32>
    %17 = arith.maximumf %15, %16 : vector<512x128xf32>
    %18 = arith.truncf %17 : vector<512x128xf32> to vector<512x128xbf16>
    %c160 = arith.constant 160 : index
    %c0_9 = arith.constant 0 : index
    %19 = vector.load %arg2[%c160, %c0_9] : memref<544x128xbf16, #tpu.memory_space<vmem>>, vector<128x128xbf16>
    %cst_10 = arith.constant dense<0.000000e+00> : vector<512x128xf32>
    %20 = tpu.matmul %18, %19, %cst_10 {dimension_numbers = #tpu.dot_dimension_numbers<[1], [0], [0], [1], [0, 0, 1, 1], [], []>} : vector<512x128xbf16>, vector<128x128xbf16>, vector<512x128xf32> -> vector<512x128xf32>
    %21 = vector.extract_strided_slice %0 {offsets = [2, 0], sizes = [1, 128], strides = [1, 1]} : vector<8x128xf32> to vector<1x128xf32>
    %22 = vector.broadcast %21 : vector<1x128xf32> to vector<512x128xf32>
    %23 = arith.addf %20, %22 : vector<512x128xf32>
    %cst_11 = arith.constant 0.000000e+00 : f32
    %24 = vector.broadcast %cst_11 : f32 to vector<512x128xf32>
    %25 = arith.maximumf %23, %24 : vector<512x128xf32>
    %26 = arith.truncf %25 : vector<512x128xf32> to vector<512x128xbf16>
    %c288 = arith.constant 288 : index
    %c0_12 = arith.constant 0 : index
    %27 = vector.load %arg2[%c288, %c0_12] : memref<544x128xbf16, #tpu.memory_space<vmem>>, vector<128x128xbf16>
    %cst_13 = arith.constant dense<0.000000e+00> : vector<512x128xf32>
    %28 = tpu.matmul %26, %27, %cst_13 {dimension_numbers = #tpu.dot_dimension_numbers<[1], [0], [0], [1], [0, 0, 1, 1], [], []>} : vector<512x128xbf16>, vector<128x128xbf16>, vector<512x128xf32> -> vector<512x128xf32>
    %29 = vector.extract_strided_slice %0 {offsets = [3, 0], sizes = [1, 128], strides = [1, 1]} : vector<8x128xf32> to vector<1x128xf32>
    %30 = vector.broadcast %29 : vector<1x128xf32> to vector<512x128xf32>
    %31 = arith.addf %28, %30 : vector<512x128xf32>
    %cst_14 = arith.constant 0.000000e+00 : f32
    %32 = vector.broadcast %cst_14 : f32 to vector<512x128xf32>
    %33 = arith.maximumf %31, %32 : vector<512x128xf32>
    %34 = arith.truncf %33 : vector<512x128xf32> to vector<512x128xbf16>
    %c416 = arith.constant 416 : index
    %c0_15 = arith.constant 0 : index
    %35 = vector.load %arg2[%c416, %c0_15] : memref<544x128xbf16, #tpu.memory_space<vmem>>, vector<128x128xbf16>
    %cst_16 = arith.constant dense<0.000000e+00> : vector<512x128xf32>
    %36 = tpu.matmul %34, %35, %cst_16 {dimension_numbers = #tpu.dot_dimension_numbers<[1], [0], [0], [1], [0, 0, 1, 1], [], []>} : vector<512x128xbf16>, vector<128x128xbf16>, vector<512x128xf32> -> vector<512x128xf32>
    %37 = vector.extract_strided_slice %0 {offsets = [4, 0], sizes = [1, 128], strides = [1, 1]} : vector<8x128xf32> to vector<1x128xf32>
    %38 = vector.broadcast %37 : vector<1x128xf32> to vector<512x128xf32>
    %39 = arith.addf %36, %38 : vector<512x128xf32>
    %c0_17 = arith.constant 0 : index
    %c0_18 = arith.constant 0 : index
    %40 = vector.load %arg4[%c0_17, %c0_18] : memref<512x128xf32, #tpu.memory_space<vmem>>, vector<512x128xf32>
    tpu.vector_store %arg4[%c0_17, %c0_18], %39 {strides = array<i32>} : memref<512x128xf32, #tpu.memory_space<vmem>>, vector<512x128xf32>,
    return
  }
  func.func @transform_0(%arg0: i32) -> (i32, i32) {
    %c0_i32 = arith.constant 0 : i32
    %c0_i32_0 = arith.constant 0 : i32
    return %arg0, %c0_i32 : i32, i32
  }
  func.func @transform_1(%arg0: i32) -> (i32, i32) {
    %c0_i32 = arith.constant 0 : i32
    %c0_i32_0 = arith.constant 0 : i32
    %c0_i32_1 = arith.constant 0 : i32
    return %c0_i32, %c0_i32_0 : i32, i32
  }
  func.func @transform_2(%arg0: i32) -> (i32, i32) {
    %c0_i32 = arith.constant 0 : i32
    %c0_i32_0 = arith.constant 0 : i32
    %c0_i32_1 = arith.constant 0 : i32
    return %c0_i32, %c0_i32_0 : i32, i32
  }
  func.func @transform_3(%arg0: i32) -> (i32, i32) {
    %c0_i32 = arith.constant 0 : i32
    %c0_i32_0 = arith.constant 0 : i32
    return %arg0, %c0_i32 : i32, i32
  }
}

</mosaic_0001>

<llo_original>
// kernel: qnet_forward.1
$region0: #{qnet_forward.1}
  #allocation0 [shape = 'u32[]', space=smem, size = 0x4, offset = 0x4, fixed_abs, tag = 'smem constant byte address 0x4 - core index']
  #allocation1 [shape = 'u32[72,128]{1,0:T(1,128)}', space=vmem, size = 0x9000, scoped, tag = 'internal scratch']
  %s0 = inlined_call_operand.vmem [shape: f32[512,32], index: 0, kind: input, shape index: {}]
  %s1 = inlined_call_operand.vmem [shape: bf16[544,128], index: 1, kind: input, shape index: {}]
  %s2 = inlined_call_operand.vmem [shape: f32[8,128], index: 2, kind: input, shape index: {}]
  %s3 = inlined_call_operand.vmem [shape: f32[512,128], index: 3, kind: output, shape index: {}]
  %s4 = sld [smem:[#allocation0]]
  $region22: #{qnet_forward.1} parent=0
    _
  %s6 = ssub.s32 1, %s4
  %s7 = scalar_select 0, %s6, %s4
  // Predicated region
  $region2: #{qnet_forward.1} parent=0 // pred_check
    _
  $region3: #{qnet_forward.1} parent=0 // pred_check_branch
    %9 = sbr.rel (0) target = $region5
  $region4: #{qnet_forward.1} parent=0 // pred_region
    _
  $region5: #{qnet_forward.1} parent=0 // pred_fallthru
    _
  // Predicated region
  $region6: #{qnet_forward.1} parent=0 // pred_check
    _
  $region7: #{qnet_forward.1} parent=0 // pred_check_branch
    %11 = sbr.rel (0) target = $region9
  $region8: #{qnet_forward.1} parent=0 // pred_region
    _
  $region9: #{qnet_forward.1} parent=0 // pred_fallthru
    _
  // Predicated region
  $region10: #{qnet_forward.1} parent=0 // pred_check
    _
  $region11: #{qnet_forward.1} parent=0 // pred_check_branch
    %13 = sbr.rel (0) target = $region13
  $region12: #{qnet_forward.1} parent=0 // pred_region
    _
  $region13: #{qnet_forward.1} parent=0 // pred_fallthru
    _
  %v15 = vld [vmem:[%s2] sm:$0xff]
  %v16 = vld [vmem:[%s0] sm:$0xff]
  %v17 = vld [vmem:[%s0 + $0x8] sm:$0xff]
  %v18 = vld [vmem:[%s0 + $0x10] sm:$0xff]
  %v19 = vld [vmem:[%s0 + $0x18] sm:$0xff]
  %v20 = vld [vmem:[%s0 + $0x20] sm:$0xff]
  %v21 = vld [vmem:[%s0 + $0x28] sm:$0xff]
  %v22 = vld [vmem:[%s0 + $0x30] sm:$0xff]
  %v23 = vld [vmem:[%s0 + $0x38] sm:$0xff]
  %v24 = vld [vmem:[%s0 + $0x40] sm:$0xff]
  %v25 = vld [vmem:[%s0 + $0x48] sm:$0xff]
  %v26 = vld [vmem:[%s0 + $0x50] sm:$0xff]
  %v27 = vld [vmem:[%s0 + $0x58] sm:$0xff]
  %v28 = vld [vmem:[%s0 + $0x60] sm:$0xff]
  %v29 = vld [vmem:[%s0 + $0x68] sm:$0xff]
  %v30 = vld [vmem:[%s0 + $0x70] sm:$0xff]
  %v31 = vld [vmem:[%s0 + $0x78] sm:$0xff]
  %v32 = vld [vmem:[%s0 + $0x80] sm:$0xff]
  %v33 = vld [vmem:[%s0 + $0x88] sm:$0xff]
  %v34 = vld [vmem:[%s0 + $0x90] sm:$0xff]
  %v35 = vld [vmem:[%s0 + $0x98] sm:$0xff]
  %v36 = vld [vmem:[%s0 + $0xa0] sm:$0xff]
  %v37 = vld [vmem:[%s0 + $0xa8] sm:$0xff]
  %v38 = vld [vmem:[%s0 + $0xb0] sm:$0xff]
  %v39 = vld [vmem:[%s0 + $0xb8] sm:$0xff]
  %v40 = vld [vmem:[%s0 + $0xc0] sm:$0xff]
  %v41 = vld [vmem:[%s0 + $0xc8] sm:$0xff]
  %v42 = vld [vmem:[%s0 + $0xd0] sm:$0xff]
  %v43 = vld [vmem:[%s0 + $0xd8] sm:$0xff]
  %v44 = vld [vmem:[%s0 + $0xe0] sm:$0xff]
  %v45 = vld [vmem:[%s0 + $0xe8] sm:$0xff]
  %v46 = vld [vmem:[%s0 + $0xf0] sm:$0xff]
  %v47 = vld [vmem:[%s0 + $0xf8] sm:$0xff]
  %v48 = vld [vmem:[%s0 + $0x100] sm:$0xff]
  %v49 = vld [vmem:[%s0 + $0x108] sm:$0xff]
  %v50 = vld [vmem:[%s0 + $0x110] sm:$0xff]
  %v51 = vld [vmem:[%s0 + $0x118] sm:$0xff]
  %v52 = vld [vmem:[%s0 + $0x120] sm:$0xff]
  %v53 = vld [vmem:[%s0 + $0x128] sm:$0xff]
  %v54 = vld [vmem:[%s0 + $0x130] sm:$0xff]
  %v55 = vld [vmem:[%s0 + $0x138] sm:$0xff]
  %v56 = vld [vmem:[%s0 + $0x140] sm:$0xff]
  %v57 = vld [vmem:[%s0 + $0x148] sm:$0xff]
  %v58 = vld [vmem:[%s0 + $0x150] sm:$0xff]
  %v59 = vld [vmem:[%s0 + $0x158] sm:$0xff]
  %v60 = vld [vmem:[%s0 + $0x160] sm:$0xff]
  %v61 = vld [vmem:[%s0 + $0x168] sm:$0xff]
  %v62 = vld [vmem:[%s0 + $0x170] sm:$0xff]
  %v63 = vld [vmem:[%s0 + $0x178] sm:$0xff]
  %v64 = vld [vmem:[%s0 + $0x180] sm:$0xff]
  %v65 = vld [vmem:[%s0 + $0x188] sm:$0xff]
  %v66 = vld [vmem:[%s0 + $0x190] sm:$0xff]
  %v67 = vld [vmem:[%s0 + $0x198] sm:$0xff]
  %v68 = vld [vmem:[%s0 + $0x1a0] sm:$0xff]
  %v69 = vld [vmem:[%s0 + $0x1a8] sm:$0xff]
  %v70 = vld [vmem:[%s0 + $0x1b0] sm:$0xff]
  %v71 = vld [vmem:[%s0 + $0x1b8] sm:$0xff]
  %v72 = vld [vmem:[%s0 + $0x1c0] sm:$0xff]
  %v73 = vld [vmem:[%s0 + $0x1c8] sm:$0xff]
  %v74 = vld [vmem:[%s0 + $0x1d0] sm:$0xff]
  %v75 = vld [vmem:[%s0 + $0x1d8] sm:$0xff]
  %v76 = vld [vmem:[%s0 + $0x1e0] sm:$0xff]
  %v77 = vld [vmem:[%s0 + $0x1e8] sm:$0xff]
  %v78 = vld [vmem:[%s0 + $0x1f0] sm:$0xff]
  %v79 = vld [vmem:[%s0 + $0x1f8] sm:$0xff]
  %v80 = vpack.c.bf16 %v17, %v16
  %v81 = vpack.c.bf16 %v19, %v18
  %v82 = vpack.c.bf16 %v21, %v20
  %v83 = vpack.c.bf16 %v23, %v22
  %v84 = vpack.c.bf16 %v25, %v24
  %v85 = vpack.c.bf16 %v27, %v26
  %v86 = vpack.c.bf16 %v29, %v28
  %v87 = vpack.c.bf16 %v31, %v30
  %v88 = vpack.c.bf16 %v33, %v32
  %v89 = vpack.c.bf16 %v35, %v34
  %v90 = vpack.c.bf16 %v37, %v36
  %v91 = vpack.c.bf16 %v39, %v38
  %v92 = vpack.c.bf16 %v41, %v40
  %v93 = vpack.c.bf16 %v43, %v42
  %v94 = vpack.c.bf16 %v45, %v44
  %v95 = vpack.c.bf16 %v47, %v46
  %v96 = vpack.c.bf16 %v49, %v48
  %v97 = vpack.c.bf16 %v51, %v50
  %v98 = vpack.c.bf16 %v53, %v52
  %v99 = vpack.c.bf16 %v55, %v54
  %v100 = vpack.c.bf16 %v57, %v56
  %v101 = vpack.c.bf16 %v59, %v58
  %v102 = vpack.c.bf16 %v61, %v60
  %v103 = vpack.c.bf16 %v63, %v62
  %v104 = vpack.c.bf16 %v65, %v64
  %v105 = vpack.c.bf16 %v67, %v66
  %v106 = vpack.c.bf16 %v69, %v68
  %v107 = vpack.c.bf16 %v71, %v70
  %v108 = vpack.c.bf16 %v73, %v72
  %v109 = vpack.c.bf16 %v75, %v74
  %v110 = vpack.c.bf16 %v77, %v76
  %v111 = vpack.c.bf16 %v79, %v78
  %v112 = vld [vmem:[%s1] sm:$0xf]
  %v113 = vld [vmem:[%s1 + $0x4] sm:$0xf]
  %v114 = vld [vmem:[%s1 + $0x8] sm:$0xf]
  %v115 = vld [vmem:[%s1 + $0xc] sm:$0xf]
  %v116 = vperm.slane %v15, 0
  %v121 = vunpack.c.l.b16 %v112
  %v122 = vunpack.c.l.b16 %v113
  %v123 = vunpack.c.l.b16 %v114
  %v124 = vunpack.c.l.b16 %v115
  %v125 = vpack.c.b16 %v122, %v121
  %v126 = vpack.c.b16 %v124, %v123
  %vm129 = vcmask 261120
  %v131 = vsel %vm129, %v80, 0
  %v134 = vsel %vm129, %v81, 0
  %v137 = vsel %vm129, %v82, 0
  %v140 = vsel %vm129, %v83, 0
  %v143 = vsel %vm129, %v84, 0
  %v146 = vsel %vm129, %v85, 0
  %v149 = vsel %vm129, %v86, 0
  %v152 = vsel %vm129, %v87, 0
  %v155 = vsel %vm129, %v88, 0
  %v158 = vsel %vm129, %v89, 0
  %v161 = vsel %vm129, %v90, 0
  %v164 = vsel %vm129, %v91, 0
  %v167 = vsel %vm129, %v92, 0
  %v170 = vsel %vm129, %v93, 0
  %v173 = vsel %vm129, %v94, 0
  %v176 = vsel %vm129, %v95, 0
  %v179 = vsel %vm129, %v96, 0
  %v182 = vsel %vm129, %v97, 0
  %v185 = vsel %vm129, %v98, 0
  %v188 = vsel %vm129, %v99, 0
  %v191 = vsel %vm129, %v100, 0
  %v194 = vsel %vm129, %v101, 0
  %v197 = vsel %vm129, %v102, 0
  %v200 = vsel %vm129, %v103, 0
  %v203 = vsel %vm129, %v104, 0
  %v206 = vsel %vm129, %v105, 0
  %v209 = vsel %vm129, %v106, 0
  %v212 = vsel %vm129, %v107, 0
  %v215 = vsel %vm129, %v108, 0
  %v218 = vsel %vm129, %v109, 0
  %v221 = vsel %vm129, %v110, 0
  %v224 = vsel %vm129, %v111, 0
  %226 = vmatpush.bf16.msra.mxu0 0
  %227 = vmatpush.bf16.msra.mxu0 0
  %228 = vmatpush.bf16.msra.mxu0 0
  %229 = vmatpush.bf16.msra.mxu0 0
  %230 = vmatpush.bf16.msra.mxu0 0
  %231 = vmatpush.bf16.msra.mxu0 0
  %232 = vmatpush.bf16.msra.mxu0 %v126
  %233 = vmatpush.bf16.msra.mxu0 %v125
  %234 = vmatmul.bf16.gmra.mxu0 %v131
  %v235 = vpop.f32.mrf.mxu0
  %v236 = vadd.f32 %v116, %v235
  %v237 = vpop.f32.mrf.mxu0
  %v238 = vadd.f32 %v116, %v237
  %239 = vmatmul.bf16.gmra.mxu0 %v134
  %v240 = vpop.f32.mrf.mxu0
  %v241 = vadd.f32 %v116, %v240
  %v242 = vpop.f32.mrf.mxu0
  %v243 = vadd.f32 %v116, %v242
  %244 = vmatmul.bf16.gmra.mxu0 %v137
  %v245 = vpop.f32.mrf.mxu0
  %v246 = vadd.f32 %v116, %v245
  %v247 = vpop.f32.mrf.mxu0
  %v248 = vadd.f32 %v116, %v247
  %249 = vmatmul.bf16.gmra.mxu0 %v140
  %v250 = vpop.f32.mrf.mxu0
  %v251 = vadd.f32 %v116, %v250
  %v252 = vpop.f32.mrf.mxu0
  %v253 = vadd.f32 %v116, %v252
  %254 = vmatmul.bf16.gmra.mxu0 %v143
  %v255 = vpop.f32.mrf.mxu0
  %v256 = vadd.f32 %v116, %v255
  %v257 = vpop.f32.mrf.mxu0
  %v258 = vadd.f32 %v116, %v257
  %259 = vmatmul.bf16.gmra.mxu0 %v146
  %v260 = vpop.f32.mrf.mxu0
  %v261 = vadd.f32 %v116, %v260
  %v262 = vpop.f32.mrf.mxu0
  %v263 = vadd.f32 %v116, %v262
  %264 = vmatmul.bf16.gmra.mxu0 %v149
  %v265 = vpop.f32.mrf.mxu0
  %v266 = vadd.f32 %v116, %v265
  %v267 = vpop.f32.mrf.mxu0
  %v268 = vadd.f32 %v116, %v267
  %269 = vmatmul.bf16.gmra.mxu0 %v152
  %v270 = vpop.f32.mrf.mxu0
  %v271 = vadd.f32 %v116, %v270
  %v272 = vpop.f32.mrf.mxu0
  %v273 = vadd.f32 %v116, %v272
  %274 = vmatmul.bf16.gmra.mxu0 %v155
  %v275 = vpop.f32.mrf.mxu0
  %v276 = vadd.f32 %v116, %v275
  %v277 = vpop.f32.mrf.mxu0
  %v278 = vadd.f32 %v116, %v277
  %279 = vmatmul.bf16.gmra.mxu0 %v158
  %v280 = vpop.f32.mrf.mxu0
  %v281 = vadd.f32 %v116, %v280
  %v282 = vpop.f32.mrf.mxu0
  %v283 = vadd.f32 %v116, %v282
  %284 = vmatmul.bf16.gmra.mxu0 %v161
  %v285 = vpop.f32.mrf.mxu0
  %v286 = vadd.f32 %v116, %v285
  %v287 = vpop.f32.mrf.mxu0
  %v288 = vadd.f32 %v116, %v287
  %289 = vmatmul.bf16.gmra.mxu0 %v164
  %v290 = vpop.f32.mrf.mxu0
  %v291 = vadd.f32 %v116, %v290
  %v292 = vpop.f32.mrf.mxu0
  %v293 = vadd.f32 %v116, %v292
  %294 = vmatmul.bf16.gmra.mxu0 %v167
  %v295 = vpop.f32.mrf.mxu0
  %v296 = vadd.f32 %v116, %v295
  %v297 = vpop.f32.mrf.mxu0
  %v298 = vadd.f32 %v116, %v297
  %299 = vmatmul.bf16.gmra.mxu0 %v170
  %v300 = vpop.f32.mrf.mxu0
  %v301 = vadd.f32 %v116, %v300
  %v302 = vpop.f32.mrf.mxu0
  %v303 = vadd.f32 %v116, %v302
  %304 = vmatmul.bf16.gmra.mxu0 %v173
  %v305 = vpop.f32.mrf.mxu0
  %v306 = vadd.f32 %v116, %v305
  %v307 = vpop.f32.mrf.mxu0
  %v308 = vadd.f32 %v116, %v307
  %309 = vmatmul.bf16.gmra.mxu0 %v176
  %v310 = vpop.f32.mrf.mxu0
  %v311 = vadd.f32 %v116, %v310
  %v312 = vpop.f32.mrf.mxu0
  %v313 = vadd.f32 %v116, %v312
  %314 = vmatmul.bf16.gmra.mxu0 %v179
  %v315 = vpop.f32.mrf.mxu0
  %v316 = vadd.f32 %v116, %v315
  %v317 = vpop.f32.mrf.mxu0
  %v318 = vadd.f32 %v116, %v317
  %319 = vmatmul.bf16.gmra.mxu0 %v182
  %v320 = vpop.f32.mrf.mxu0
  %v321 = vadd.f32 %v116, %v320
  %v322 = vpop.f32.mrf.mxu0
  %v323 = vadd.f32 %v116, %v322
  %324 = vmatmul.bf16.gmra.mxu0 %v185
  %v325 = vpop.f32.mrf.mxu0
  %v326 = vadd.f32 %v116, %v325
  %v327 = vpop.f32.mrf.mxu0
  %v328 = vadd.f32 %v116, %v327
  %329 = vmatmul.bf16.gmra.mxu0 %v188
  %v330 = vpop.f32.mrf.mxu0
  %v331 = vadd.f32 %v116, %v330
  %v332 = vpop.f32.mrf.mxu0
  %v333 = vadd.f32 %v116, %v332
  %334 = vmatmul.bf16.gmra.mxu0 %v191
  %v335 = vpop.f32.mrf.mxu0
  %v336 = vadd.f32 %v116, %v335
  %v337 = vpop.f32.mrf.mxu0
  %v338 = vadd.f32 %v116, %v337
  %339 = vmatmul.bf16.gmra.mxu0 %v194
  %v340 = vpop.f32.mrf.mxu0
  %v341 = vadd.f32 %v116, %v340
  %v342 = vpop.f32.mrf.mxu0
  %v343 = vadd.f32 %v116, %v342
  %344 = vmatmul.bf16.gmra.mxu0 %v197
  %v345 = vpop.f32.mrf.mxu0
  %v346 = vadd.f32 %v116, %v345
  %v347 = vpop.f32.mrf.mxu0
  %v348 = vadd.f32 %v116, %v347
  %349 = vmatmul.bf16.gmra.mxu0 %v200
  %v350 = vpop.f32.mrf.mxu0
  %v351 = vadd.f32 %v116, %v350
  %v352 = vpop.f32.mrf.mxu0
  %v353 = vadd.f32 %v116, %v352
  %354 = vmatmul.bf16.gmra.mxu0 %v203
  %v355 = vpop.f32.mrf.mxu0
  %v356 = vadd.f32 %v116, %v355
  %v357 = vpop.f32.mrf.mxu0
  %v358 = vadd.f32 %v116, %v357
  %359 = vmatmul.bf16.gmra.mxu0 %v206
  %v360 = vpop.f32.mrf.mxu0
  %v361 = vadd.f32 %v116, %v360
  %v362 = vpop.f32.mrf.mxu0
  %v363 = vadd.f32 %v116, %v362
  %364 = vmatmul.bf16.gmra.mxu0 %v209
  %v365 = vpop.f32.mrf.mxu0
  %v366 = vadd.f32 %v116, %v365
  %v367 = vpop.f32.mrf.mxu0
  %v368 = vadd.f32 %v116, %v367
  %369 = vmatmul.bf16.gmra.mxu0 %v212
  %v370 = vpop.f32.mrf.mxu0
  %v371 = vadd.f32 %v116, %v370
  %v372 = vpop.f32.mrf.mxu0
  %v373 = vadd.f32 %v116, %v372
  %374 = vmatmul.bf16.gmra.mxu0 %v215
  %v375 = vpop.f32.mrf.mxu0
  %v376 = vadd.f32 %v116, %v375
  %v377 = vpop.f32.mrf.mxu0
  %v378 = vadd.f32 %v116, %v377
  %379 = vmatmul.bf16.gmra.mxu0 %v218
  %v380 = vpop.f32.mrf.mxu0
  %v381 = vadd.f32 %v116, %v380
  %v382 = vpop.f32.mrf.mxu0
  %v383 = vadd.f32 %v116, %v382
  %384 = vmatmul.bf16.gmra.mxu0 %v221
  %v385 = vpop.f32.mrf.mxu0
  %v386 = vadd.f32 %v116, %v385
  %v387 = vpop.f32.mrf.mxu0
  %v388 = vadd.f32 %v116, %v387
  %389 = vmatmul.bf16.gmra.mxu0 %v224
  %v390 = vpop.f32.mrf.mxu0
  %v391 = vadd.f32 %v116, %v390
  %v392 = vpop.f32.mrf.mxu0
  %v393 = vadd.f32 %v116, %v392
  %394 = vdwg.mxu0
  %v395 = vmax.f32 %v236, 0.0
  %v396 = vmax.f32 %v238, 0.0
  %v397 = vmax.f32 %v241, 0.0
  %v398 = vmax.f32 %v243, 0.0
  %v399 = vmax.f32 %v246, 0.0
  %v400 = vmax.f32 %v248, 0.0
  %v401 = vmax.f32 %v251, 0.0
  %v402 = vmax.f32 %v253, 0.0
  %v403 = vmax.f32 %v256, 0.0
  %v404 = vmax.f32 %v258, 0.0
  %v405 = vmax.f32 %v261, 0.0
  %v406 = vmax.f32 %v263, 0.0
  %v407 = vmax.f32 %v266, 0.0
  %v408 = vmax.f32 %v268, 0.0
  %v409 = vmax.f32 %v271, 0.0
  %v410 = vmax.f32 %v273, 0.0
  %v411 = vmax.f32 %v276, 0.0
  %v412 = vmax.f32 %v278, 0.0
  %v413 = vmax.f32 %v281, 0.0
  %v414 = vmax.f32 %v283, 0.0
  %v415 = vmax.f32 %v286, 0.0
  %v416 = vmax.f32 %v288, 0.0
  %v417 = vmax.f32 %v291, 0.0
  %v418 = vmax.f32 %v293, 0.0
  %v419 = vmax.f32 %v296, 0.0
  %v420 = vmax.f32 %v298, 0.0
  %v421 = vmax.f32 %v301, 0.0
  %v422 = vmax.f32 %v303, 0.0
  %v423 = vmax.f32 %v306, 0.0
  %v424 = vmax.f32 %v308, 0.0
  %v425 = vmax.f32 %v311, 0.0
  %v426 = vmax.f32 %v313, 0.0
  %v427 = vmax.f32 %v316, 0.0
  %v428 = vmax.f32 %v318, 0.0
  %v429 = vmax.f32 %v321, 0.0
  %v430 = vmax.f32 %v323, 0.0
  %v431 = vmax.f32 %v326, 0.0
  %v432 = vmax.f32 %v328, 0.0
  %v433 = vmax.f32 %v331, 0.0
  %v434 = vmax.f32 %v333, 0.0
  %v435 = vmax.f32 %v336, 0.0
  %v436 = vmax.f32 %v338, 0.0
  %v437 = vmax.f32 %v341, 0.0
  %v438 = vmax.f32 %v343, 0.0
  %v439 = vmax.f32 %v346, 0.0
  %v440 = vmax.f32 %v348, 0.0
  %v441 = vmax.f32 %v351, 0.0
  %v442 = vmax.f32 %v353, 0.0
  %v443 = vmax.f32 %v356, 0.0
  %v444 = vmax.f32 %v358, 0.0
  %v445 = vmax.f32 %v361, 0.0
  %v446 = vmax.f32 %v363, 0.0
  %v447 = vmax.f32 %v366, 0.0
  %v448 = vmax.f32 %v368, 0.0
  %v449 = vmax.f32 %v371, 0.0
  %v450 = vmax.f32 %v373, 0.0
  %v451 = vmax.f32 %v376, 0.0
  %v452 = vmax.f32 %v378, 0.0
  %v453 = vmax.f32 %v381, 0.0
  %v454 = vmax.f32 %v383, 0.0
  %v455 = vmax.f32 %v386, 0.0
  %v456 = vmax.f32 %v388, 0.0
  %v457 = vmax.f32 %v391, 0.0
  %v458 = vmax.f32 %v393, 0.0
  %v459 = vpack.c.bf16 %v396, %v395
  %v460 = vpack.c.bf16 %v398, %v397
  %v461 = vpack.c.bf16 %v400, %v399
  %v462 = vpack.c.bf16 %v402, %v401
  %v463 = vpack.c.bf16 %v404, %v403
  %v464 = vpack.c.bf16 %v406, %v405
  %v465 = vpack.c.bf16 %v408, %v407
  %v466 = vpack.c.bf16 %v410, %v409
  %v467 = vpack.c.bf16 %v412, %v411
  %v468 = vpack.c.bf16 %v414, %v413
  %v469 = vpack.c.bf16 %v416, %v415
  %v470 = vpack.c.bf16 %v418, %v417
  %v471 = vpack.c.bf16 %v420, %v419
  %v472 = vpack.c.bf16 %v422, %v421
  %v473 = vpack.c.bf16 %v424, %v423
  %v474 = vpack.c.bf16 %v426, %v425
  %v475 = vpack.c.bf16 %v428, %v427
  %v476 = vpack.c.bf16 %v430, %v429
  %v477 = vpack.c.bf16 %v432, %v431
  %v478 = vpack.c.bf16 %v434, %v433
  %v479 = vpack.c.bf16 %v436, %v435
  %v480 = vpack.c.bf16 %v438, %v437
  %v481 = vpack.c.bf16 %v440, %v439
  %v482 = vpack.c.bf16 %v442, %v441
  %v483 = vpack.c.bf16 %v444, %v443
  %v484 = vpack.c.bf16 %v446, %v445
  %v485 = vpack.c.bf16 %v448, %v447
  %v486 = vpack.c.bf16 %v450, %v449
  %v487 = vpack.c.bf16 %v452, %v451
  %v488 = vpack.c.bf16 %v454, %v453
  %v489 = vpack.c.bf16 %v456, %v455
  %v490 = vpack.c.bf16 %v458, %v457
  %v491 = vld [vmem:[%s1 + $0x10] sm:$0xf]
  %v492 = vld [vmem:[%s1 + $0x14] sm:$0xf]
  %v493 = vld [vmem:[%s1 + $0x18] sm:$0xf]
  %v494 = vld [vmem:[%s1 + $0x1c] sm:$0xf]
  %v495 = vld [vmem:[%s1 + $0x20] sm:$0xf]
  %v496 = vld [vmem:[%s1 + $0x24] sm:$0xf]
  %v497 = vld [vmem:[%s1 + $0x28] sm:$0xf]
  %v498 = vld [vmem:[%s1 + $0x2c] sm:$0xf]
  %v499 = vld [vmem:[%s1 + $0x30] sm:$0xf]
  %v500 = vld [vmem:[%s1 + $0x34] sm:$0xf]
  %v501 = vld [vmem:[%s1 + $0x38] sm:$0xf]
  %v502 = vld [vmem:[%s1 + $0x3c] sm:$0xf]
  %v503 = vld [vmem:[%s1 + $0x40] sm:$0xf]
  %v504 = vld [vmem:[%s1 + $0x44] sm:$0xf]
  %v505 = vld [vmem:[%s1 + $0x48] sm:$0xf]
  %v506 = vld [vmem:[%s1 + $0x4c] sm:$0xf]
  %v507 = vperm.slane %v15, 1
  %v524 = vunpack.c.l.b16 %v491
  %v525 = vunpack.c.l.b16 %v492
  %v526 = vunpack.c.l.b16 %v493
  %v527 = vunpack.c.l.b16 %v494
  %v528 = vunpack.c.l.b16 %v495
  %v529 = vunpack.c.l.b16 %v496
  %v530 = vunpack.c.l.b16 %v497
  %v531 = vunpack.c.l.b16 %v498
  %v532 = vunpack.c.l.b16 %v499
  %v533 = vunpack.c.l.b16 %v500
  %v534 = vunpack.c.l.b16 %v501
  %v535 = vunpack.c.l.b16 %v502
  %v536 = vunpack.c.l.b16 %v503
  %v537 = vunpack.c.l.b16 %v504
  %v538 = vunpack.c.l.b16 %v505
  %v539 = vunpack.c.l.b16 %v506
  %v540 = vpack.c.b16 %v525, %v524
  %v541 = vpack.c.b16 %v527, %v526
  %v542 = vpack.c.b16 %v529, %v528
  %v543 = vpack.c.b16 %v531, %v530
  %v544 = vpack.c.b16 %v533, %v532
  %v545 = vpack.c.b16 %v535, %v534
  %v546 = vpack.c.b16 %v537, %v536
  %v547 = vpack.c.b16 %v539, %v538
  %556 = vmatpush.bf16.msra.mxu0 %v547
  %557 = vmatpush.bf16.msra.mxu0 %v546
  %558 = vmatpush.bf16.msra.mxu0 %v545
  %559 = vmatpush.bf16.msra.mxu0 %v544
  %560 = vmatpush.bf16.msra.mxu0 %v543
  %561 = vmatpush.bf16.msra.mxu0 %v542
  %562 = vmatpush.bf16.msra.mxu0 %v541
  %563 = vmatpush.bf16.msra.mxu0 %v540
  %564 = vmatmul.bf16.gmra.mxu0 %v459
  %v565 = vpop.f32.mrf.mxu0
  %v566 = vadd.f32 %v507, %v565
  %v567 = vpop.f32.mrf.mxu0
  %v568 = vadd.f32 %v507, %v567
  %569 = vmatmul.bf16.gmra.mxu0 %v460
  %v570 = vpop.f32.mrf.mxu0
  %v571 = vadd.f32 %v507, %v570
  %v572 = vpop.f32.mrf.mxu0
  %v573 = vadd.f32 %v507, %v572
  %574 = vmatmul.bf16.gmra.mxu0 %v461
  %v575 = vpop.f32.mrf.mxu0
  %v576 = vadd.f32 %v507, %v575
  %v577 = vpop.f32.mrf.mxu0
  %v578 = vadd.f32 %v507, %v577
  %579 = vmatmul.bf16.gmra.mxu0 %v462
  %v580 = vpop.f32.mrf.mxu0
  %v581 = vadd.f32 %v507, %v580
  %v582 = vpop.f32.mrf.mxu0
  %v583 = vadd.f32 %v507, %v582
  %584 = vmatmul.bf16.gmra.mxu0 %v463
  %v585 = vpop.f32.mrf.mxu0
  %v586 = vadd.f32 %v507, %v585
  %v587 = vpop.f32.mrf.mxu0
  %v588 = vadd.f32 %v507, %v587
  %589 = vmatmul.bf16.gmra.mxu0 %v464
  %v590 = vpop.f32.mrf.mxu0
  %v591 = vadd.f32 %v507, %v590
  %v592 = vpop.f32.mrf.mxu0
  %v593 = vadd.f32 %v507, %v592
  %594 = vmatmul.bf16.gmra.mxu0 %v465
  %v595 = vpop.f32.mrf.mxu0
  %v596 = vadd.f32 %v507, %v595
  %v597 = vpop.f32.mrf.mxu0
  %v598 = vadd.f32 %v507, %v597
  %599 = vmatmul.bf16.gmra.mxu0 %v466
  %v600 = vpop.f32.mrf.mxu0
  %v601 = vadd.f32 %v507, %v600
  %v602 = vpop.f32.mrf.mxu0
  %v603 = vadd.f32 %v507, %v602
  %604 = vmatmul.bf16.gmra.mxu0 %v467
  %v605 = vpop.f32.mrf.mxu0
  %v606 = vadd.f32 %v507, %v605
  %v607 = vpop.f32.mrf.mxu0
  %v608 = vadd.f32 %v507, %v607
  %609 = vmatmul.bf16.gmra.mxu0 %v468
  %v610 = vpop.f32.mrf.mxu0
  %v611 = vadd.f32 %v507, %v610
  %v612 = vpop.f32.mrf.mxu0
  %v613 = vadd.f32 %v507, %v612
  %614 = vmatmul.bf16.gmra.mxu0 %v469
  %v615 = vpop.f32.mrf.mxu0
  %v616 = vadd.f32 %v507, %v615
  %v617 = vpop.f32.mrf.mxu0
  %v618 = vadd.f32 %v507, %v617
  %619 = vmatmul.bf16.gmra.mxu0 %v470
  %v620 = vpop.f32.mrf.mxu0
  %v621 = vadd.f32 %v507, %v620
  %v622 = vpop.f32.mrf.mxu0
  %v623 = vadd.f32 %v507, %v622
  %624 = vmatmul.bf16.gmra.mxu0 %v471
  %v625 = vpop.f32.mrf.mxu0
  %v626 = vadd.f32 %v507, %v625
  %v627 = vpop.f32.mrf.mxu0
  %v628 = vadd.f32 %v507, %v627
  %629 = vmatmul.bf16.gmra.mxu0 %v472
  %v630 = vpop.f32.mrf.mxu0
  %v631 = vadd.f32 %v507, %v630
  %v632 = vpop.f32.mrf.mxu0
  %v633 = vadd.f32 %v507, %v632
  %634 = vmatmul.bf16.gmra.mxu0 %v473
  %v635 = vpop.f32.mrf.mxu0
  %v636 = vadd.f32 %v507, %v635
  %v637 = vpop.f32.mrf.mxu0
  %v638 = vadd.f32 %v507, %v637
  %639 = vmatmul.bf16.gmra.mxu0 %v474
  %v640 = vpop.f32.mrf.mxu0
  %v641 = vadd.f32 %v507, %v640
  %v642 = vpop.f32.mrf.mxu0
  %v643 = vadd.f32 %v507, %v642
  %644 = vmatmul.bf16.gmra.mxu0 %v475
  %v645 = vpop.f32.mrf.mxu0
  %v646 = vadd.f32 %v507, %v645
  %v647 = vpop.f32.mrf.mxu0
  %v648 = vadd.f32 %v507, %v647
  %649 = vmatmul.bf16.gmra.mxu0 %v476
  %v650 = vpop.f32.mrf.mxu0
  %v651 = vadd.f32 %v507, %v650
  %v652 = vpop.f32.mrf.mxu0
  %v653 = vadd.f32 %v507, %v652
  %654 = vmatmul.bf16.gmra.mxu0 %v477
  %v655 = vpop.f32.mrf.mxu0
  %v656 = vadd.f32 %v507, %v655
  %v657 = vpop.f32.mrf.mxu0
  %v658 = vadd.f32 %v507, %v657
  %659 = vmatmul.bf16.gmra.mxu0 %v478
  %v660 = vpop.f32.mrf.mxu0
  %v661 = vadd.f32 %v507, %v660
  %v662 = vpop.f32.mrf.mxu0
  %v663 = vadd.f32 %v507, %v662
  %664 = vmatmul.bf16.gmra.mxu0 %v479
  %v665 = vpop.f32.mrf.mxu0
  %v666 = vadd.f32 %v507, %v665
  %v667 = vpop.f32.mrf.mxu0
  %v668 = vadd.f32 %v507, %v667
  %669 = vmatmul.bf16.gmra.mxu0 %v480
  %v670 = vpop.f32.mrf.mxu0
  %v671 = vadd.f32 %v507, %v670
  %v672 = vpop.f32.mrf.mxu0
  %v673 = vadd.f32 %v507, %v672
  %674 = vmatmul.bf16.gmra.mxu0 %v481
  %v675 = vpop.f32.mrf.mxu0
  %v676 = vadd.f32 %v507, %v675
  %v677 = vpop.f32.mrf.mxu0
  %v678 = vadd.f32 %v507, %v677
  %679 = vmatmul.bf16.gmra.mxu0 %v482
  %v680 = vpop.f32.mrf.mxu0
  %v681 = vadd.f32 %v507, %v680
  %v682 = vpop.f32.mrf.mxu0
  %v683 = vadd.f32 %v507, %v682
  %684 = vmatmul.bf16.gmra.mxu0 %v483
  %v685 = vpop.f32.mrf.mxu0
  %v686 = vadd.f32 %v507, %v685
  %v687 = vpop.f32.mrf.mxu0
  %v688 = vadd.f32 %v507, %v687
  %689 = vmatmul.bf16.gmra.mxu0 %v484
  %v690 = vpop.f32.mrf.mxu0
  %v691 = vadd.f32 %v507, %v690
  %v692 = vpop.f32.mrf.mxu0
  %v693 = vadd.f32 %v507, %v692
  %694 = vmatmul.bf16.gmra.mxu0 %v485
  %v695 = vpop.f32.mrf.mxu0
  %v696 = vadd.f32 %v507, %v695
  %v697 = vpop.f32.mrf.mxu0
  %v698 = vadd.f32 %v507, %v697
  %699 = vmatmul.bf16.gmra.mxu0 %v486
  %v700 = vpop.f32.mrf.mxu0
  %v701 = vadd.f32 %v507, %v700
  %v702 = vpop.f32.mrf.mxu0
  %v703 = vadd.f32 %v507, %v702
  %704 = vmatmul.bf16.gmra.mxu0 %v487
  %v705 = vpop.f32.mrf.mxu0
  %v706 = vadd.f32 %v507, %v705
  %v707 = vpop.f32.mrf.mxu0
  %v708 = vadd.f32 %v507, %v707
  %709 = vmatmul.bf16.gmra.mxu0 %v488
  %v710 = vpop.f32.mrf.mxu0
  %v711 = vadd.f32 %v507, %v710
  %v712 = vpop.f32.mrf.mxu0
  %v713 = vadd.f32 %v507, %v712
  %714 = vmatmul.bf16.gmra.mxu0 %v489
  %v715 = vpop.f32.mrf.mxu0
  %v716 = vadd.f32 %v507, %v715
  %v717 = vpop.f32.mrf.mxu0
  %v718 = vadd.f32 %v507, %v717
  %719 = vmatmul.bf16.gmra.mxu0 %v490
  %v720 = vpop.f32.mrf.mxu0
  %v721 = vadd.f32 %v507, %v720
  %v722 = vpop.f32.mrf.mxu0
  %v723 = vadd.f32 %v507, %v722
  %724 = vdwg.mxu0
  %v725 = vmax.f32 %v566, 0.0
  %v726 = vmax.f32 %v568, 0.0
  %v727 = vmax.f32 %v571, 0.0
  %v728 = vmax.f32 %v573, 0.0
  %v729 = vmax.f32 %v576, 0.0
  %v730 = vmax.f32 %v578, 0.0
  %v731 = vmax.f32 %v581, 0.0
  %v732 = vmax.f32 %v583, 0.0
  %v733 = vmax.f32 %v586, 0.0
  %v734 = vmax.f32 %v588, 0.0
  %v735 = vmax.f32 %v591, 0.0
  %v736 = vmax.f32 %v593, 0.0
  %v737 = vmax.f32 %v596, 0.0
  %v738 = vmax.f32 %v598, 0.0
  %v739 = vmax.f32 %v601, 0.0
  %v740 = vmax.f32 %v603, 0.0
  %v741 = vmax.f32 %v606, 0.0
  %v742 = vmax.f32 %v608, 0.0
  %v743 = vmax.f32 %v611, 0.0
  %v744 = vmax.f32 %v613, 0.0
  %v745 = vmax.f32 %v616, 0.0
  %v746 = vmax.f32 %v618, 0.0
  %v747 = vmax.f32 %v621, 0.0
  %v748 = vmax.f32 %v623, 0.0
  %v749 = vmax.f32 %v626, 0.0
  %v750 = vmax.f32 %v628, 0.0
  %v751 = vmax.f32 %v631, 0.0
  %v752 = vmax.f32 %v633, 0.0
  %v753 = vmax.f32 %v636, 0.0
  %v754 = vmax.f32 %v638, 0.0
  %v755 = vmax.f32 %v641, 0.0
  %v756 = vmax.f32 %v643, 0.0
  %v757 = vmax.f32 %v646, 0.0
  %v758 = vmax.f32 %v648, 0.0
  %v759 = vmax.f32 %v651, 0.0
  %v760 = vmax.f32 %v653, 0.0
  %v761 = vmax.f32 %v656, 0.0
  %v762 = vmax.f32 %v658, 0.0
  %v763 = vmax.f32 %v661, 0.0
  %v764 = vmax.f32 %v663, 0.0
  %v765 = vmax.f32 %v666, 0.0
  %v766 = vmax.f32 %v668, 0.0
  %v767 = vmax.f32 %v671, 0.0
  %v768 = vmax.f32 %v673, 0.0
  %v769 = vmax.f32 %v676, 0.0
  %v770 = vmax.f32 %v678, 0.0
  %v771 = vmax.f32 %v681, 0.0
  %v772 = vmax.f32 %v683, 0.0
  %v773 = vmax.f32 %v686, 0.0
  %v774 = vmax.f32 %v688, 0.0
  %v775 = vmax.f32 %v691, 0.0
  %v776 = vmax.f32 %v693, 0.0
  %v777 = vmax.f32 %v696, 0.0
  %v778 = vmax.f32 %v698, 0.0
  %v779 = vmax.f32 %v701, 0.0
  %v780 = vmax.f32 %v703, 0.0
  %v781 = vmax.f32 %v706, 0.0
  %v782 = vmax.f32 %v708, 0.0
  %v783 = vmax.f32 %v711, 0.0
  %v784 = vmax.f32 %v713, 0.0
  %v785 = vmax.f32 %v716, 0.0
  %v786 = vmax.f32 %v718, 0.0
  %v787 = vmax.f32 %v721, 0.0
  %v788 = vmax.f32 %v723, 0.0
  %v789 = vpack.c.bf16 %v726, %v725
  %v790 = vpack.c.bf16 %v728, %v727
  %v791 = vpack.c.bf16 %v730, %v729
  %v792 = vpack.c.bf16 %v732, %v731
  %v793 = vpack.c.bf16 %v734, %v733
  %v794 = vpack.c.bf16 %v736, %v735
  %v795 = vpack.c.bf16 %v738, %v737
  %v796 = vpack.c.bf16 %v740, %v739
  %v797 = vpack.c.bf16 %v742, %v741
  %v798 = vpack.c.bf16 %v744, %v743
  %v799 = vpack.c.bf16 %v746, %v745
  %v800 = vpack.c.bf16 %v748, %v747
  %v801 = vpack.c.bf16 %v750, %v749
  %v802 = vpack.c.bf16 %v752, %v751
  %v803 = vpack.c.bf16 %v754, %v753
  %v804 = vpack.c.bf16 %v756, %v755
  %v805 = vpack.c.bf16 %v758, %v757
  %v806 = vpack.c.bf16 %v760, %v759
  %v807 = vpack.c.bf16 %v762, %v761
  %v808 = vpack.c.bf16 %v764, %v763
  %v809 = vpack.c.bf16 %v766, %v765
  %v810 = vpack.c.bf16 %v768, %v767
  %v811 = vpack.c.bf16 %v770, %v769
  %v812 = vpack.c.bf16 %v772, %v771
  %v813 = vpack.c.bf16 %v774, %v773
  %v814 = vpack.c.bf16 %v776, %v775
  %v815 = vpack.c.bf16 %v778, %v777
  %v816 = vpack.c.bf16 %v780, %v779
  %v817 = vpack.c.bf16 %v782, %v781
  %v818 = vpack.c.bf16 %v784, %v783
  %v819 = vpack.c.bf16 %v786, %v785
  %v820 = vpack.c.bf16 %v788, %v787
  %v821 = vld [vmem:[%s1 + $0x50] sm:$0xf]
  %v822 = vld [vmem:[%s1 + $0x54] sm:$0xf]
  %v823 = vld [vmem:[%s1 + $0x58] sm:$0xf]
  %v824 = vld [vmem:[%s1 + $0x5c] sm:$0xf]
  %v825 = vld [vmem:[%s1 + $0x60] sm:$0xf]
  %v826 = vld [vmem:[%s1 + $0x64] sm:$0xf]
  %v827 = vld [vmem:[%s1 + $0x68] sm:$0xf]
  %v828 = vld [vmem:[%s1 + $0x6c] sm:$0xf]
  %v829 = vld [vmem:[%s1 + $0x70] sm:$0xf]
  %v830 = vld [vmem:[%s1 + $0x74] sm:$0xf]
  %v831 = vld [vmem:[%s1 + $0x78] sm:$0xf]
  %v832 = vld [vmem:[%s1 + $0x7c] sm:$0xf]
  %v833 = vld [vmem:[%s1 + $0x80] sm:$0xf]
  %v834 = vld [vmem:[%s1 + $0x84] sm:$0xf]
  %v835 = vld [vmem:[%s1 + $0x88] sm:$0xf]
  %v836 = vld [vmem:[%s1 + $0x8c] sm:$0xf]
  %v837 = vperm.slane %v15, 2
  %v854 = vunpack.c.l.b16 %v821
  %v855 = vunpack.c.l.b16 %v822
  %v856 = vunpack.c.l.b16 %v823
  %v857 = vunpack.c.l.b16 %v824
  %v858 = vunpack.c.l.b16 %v825
  %v859 = vunpack.c.l.b16 %v826
  %v860 = vunpack.c.l.b16 %v827
  %v861 = vunpack.c.l.b16 %v828
  %v862 = vunpack.c.l.b16 %v829
  %v863 = vunpack.c.l.b16 %v830
  %v864 = vunpack.c.l.b16 %v831
  %v865 = vunpack.c.l.b16 %v832
  %v866 = vunpack.c.l.b16 %v833
  %v867 = vunpack.c.l.b16 %v834
  %v868 = vunpack.c.l.b16 %v835
  %v869 = vunpack.c.l.b16 %v836
  %v870 = vpack.c.b16 %v855, %v854
  %v871 = vpack.c.b16 %v857, %v856
  %v872 = vpack.c.b16 %v859, %v858
  %v873 = vpack.c.b16 %v861, %v860
  %v874 = vpack.c.b16 %v863, %v862
  %v875 = vpack.c.b16 %v865, %v864
  %v876 = vpack.c.b16 %v867, %v866
  %v877 = vpack.c.b16 %v869, %v868
  %886 = vmatpush.bf16.msra.mxu0 %v877
  %887 = vmatpush.bf16.msra.mxu0 %v876
  %888 = vmatpush.bf16.msra.mxu0 %v875
  %889 = vmatpush.bf16.msra.mxu0 %v874
  %890 = vmatpush.bf16.msra.mxu0 %v873
  %891 = vmatpush.bf16.msra.mxu0 %v872
  %892 = vmatpush.bf16.msra.mxu0 %v871
  %893 = vmatpush.bf16.msra.mxu0 %v870
  %894 = vmatmul.bf16.gmra.mxu0 %v789
  %v895 = vpop.f32.mrf.mxu0
  %v896 = vadd.f32 %v837, %v895
  %v897 = vpop.f32.mrf.mxu0
  %v898 = vadd.f32 %v837, %v897
  %899 = vmatmul.bf16.gmra.mxu0 %v790
  %v900 = vpop.f32.mrf.mxu0
  %v901 = vadd.f32 %v837, %v900
  %v902 = vpop.f32.mrf.mxu0
  %v903 = vadd.f32 %v837, %v902
  %904 = vmatmul.bf16.gmra.mxu0 %v791
  %v905 = vpop.f32.mrf.mxu0
  %v906 = vadd.f32 %v837, %v905
  %v907 = vpop.f32.mrf.mxu0
  %v908 = vadd.f32 %v837, %v907
  %909 = vmatmul.bf16.gmra.mxu0 %v792
  %v910 = vpop.f32.mrf.mxu0
  %v911 = vadd.f32 %v837, %v910
  %v912 = vpop.f32.mrf.mxu0
  %v913 = vadd.f32 %v837, %v912
  %914 = vmatmul.bf16.gmra.mxu0 %v793
  %v915 = vpop.f32.mrf.mxu0
  %v916 = vadd.f32 %v837, %v915
  %v917 = vpop.f32.mrf.mxu0
  %v918 = vadd.f32 %v837, %v917
  %919 = vmatmul.bf16.gmra.mxu0 %v794
  %v920 = vpop.f32.mrf.mxu0
  %v921 = vadd.f32 %v837, %v920
  %v922 = vpop.f32.mrf.mxu0
  %v923 = vadd.f32 %v837, %v922
  %924 = vmatmul.bf16.gmra.mxu0 %v795
  %v925 = vpop.f32.mrf.mxu0
  %v926 = vadd.f32 %v837, %v925
  %v927 = vpop.f32.mrf.mxu0
  %v928 = vadd.f32 %v837, %v927
  %929 = vmatmul.bf16.gmra.mxu0 %v796
  %v930 = vpop.f32.mrf.mxu0
  %v931 = vadd.f32 %v837, %v930
  %v932 = vpop.f32.mrf.mxu0
  %v933 = vadd.f32 %v837, %v932
  %934 = vmatmul.bf16.gmra.mxu0 %v797
  %v935 = vpop.f32.mrf.mxu0
  %v936 = vadd.f32 %v837, %v935
  %v937 = vpop.f32.mrf.mxu0
  %v938 = vadd.f32 %v837, %v937
  %939 = vmatmul.bf16.gmra.mxu0 %v798
  %v940 = vpop.f32.mrf.mxu0
  %v941 = vadd.f32 %v837, %v940
  %v942 = vpop.f32.mrf.mxu0
  %v943 = vadd.f32 %v837, %v942
  %944 = vmatmul.bf16.gmra.mxu0 %v799
  %v945 = vpop.f32.mrf.mxu0
  %v946 = vadd.f32 %v837, %v945
  %v947 = vpop.f32.mrf.mxu0
  %v948 = vadd.f32 %v837, %v947
  %949 = vmatmul.bf16.gmra.mxu0 %v800
  %v950 = vpop.f32.mrf.mxu0
  %v951 = vadd.f32 %v837, %v950
  %v952 = vpop.f32.mrf.mxu0
  %v953 = vadd.f32 %v837, %v952
  %954 = vmatmul.bf16.gmra.mxu0 %v801
  %v955 = vpop.f32.mrf.mxu0
  %v956 = vadd.f32 %v837, %v955
  %v957 = vpop.f32.mrf.mxu0
  %v958 = vadd.f32 %v837, %v957
  %959 = vmatmul.bf16.gmra.mxu0 %v802
  %v960 = vpop.f32.mrf.mxu0
  %v961 = vadd.f32 %v837, %v960
  %v962 = vpop.f32.mrf.mxu0
  %v963 = vadd.f32 %v837, %v962
  %964 = vmatmul.bf16.gmra.mxu0 %v803
  %v965 = vpop.f32.mrf.mxu0
  %v966 = vadd.f32 %v837, %v965
  %v967 = vpop.f32.mrf.mxu0
  %v968 = vadd.f32 %v837, %v967
  %969 = vmatmul.bf16.gmra.mxu0 %v804
  %v970 = vpop.f32.mrf.mxu0
  %v971 = vadd.f32 %v837, %v970
  %v972 = vpop.f32.mrf.mxu0
  %v973 = vadd.f32 %v837, %v972
  %974 = vmatmul.bf16.gmra.mxu0 %v805
  %v975 = vpop.f32.mrf.mxu0
  %v976 = vadd.f32 %v837, %v975
  %v977 = vpop.f32.mrf.mxu0
  %v978 = vadd.f32 %v837, %v977
  %979 = vmatmul.bf16.gmra.mxu0 %v806
  %v980 = vpop.f32.mrf.mxu0
  %v981 = vadd.f32 %v837, %v980
  %v982 = vpop.f32.mrf.mxu0
  %v983 = vadd.f32 %v837, %v982
  %984 = vmatmul.bf16.gmra.mxu0 %v807
  %v985 = vpop.f32.mrf.mxu0
  %v986 = vadd.f32 %v837, %v985
  %v987 = vpop.f32.mrf.mxu0
  %v988 = vadd.f32 %v837, %v987
  %989 = vmatmul.bf16.gmra.mxu0 %v808
  %v990 = vpop.f32.mrf.mxu0
  %v991 = vadd.f32 %v837, %v990
  %v992 = vpop.f32.mrf.mxu0
  %v993 = vadd.f32 %v837, %v992
  %994 = vmatmul.bf16.gmra.mxu0 %v809
  %v995 = vpop.f32.mrf.mxu0
  %v996 = vadd.f32 %v837, %v995
  %v997 = vpop.f32.mrf.mxu0
  %v998 = vadd.f32 %v837, %v997
  %999 = vmatmul.bf16.gmra.mxu0 %v810
  %v1000 = vpop.f32.mrf.mxu0
  %v1001 = vadd.f32 %v837, %v1000
  %v1002 = vpop.f32.mrf.mxu0
  %v1003 = vadd.f32 %v837, %v1002
  %1004 = vmatmul.bf16.gmra.mxu0 %v811
  %v1005 = vpop.f32.mrf.mxu0
  %v1006 = vadd.f32 %v837, %v1005
  %v1007 = vpop.f32.mrf.mxu0
  %v1008 = vadd.f32 %v837, %v1007
  %1009 = vmatmul.bf16.gmra.mxu0 %v812
  %v1010 = vpop.f32.mrf.mxu0
  %v1011 = vadd.f32 %v837, %v1010
  %v1012 = vpop.f32.mrf.mxu0
  %v1013 = vadd.f32 %v837, %v1012
  %1014 = vmatmul.bf16.gmra.mxu0 %v813
  %v1015 = vpop.f32.mrf.mxu0
  %v1016 = vadd.f32 %v837, %v1015
  %v1017 = vpop.f32.mrf.mxu0
  %v1018 = vadd.f32 %v837, %v1017
  %1019 = vmatmul.bf16.gmra.mxu0 %v814
  %v1020 = vpop.f32.mrf.mxu0
  %v1021 = vadd.f32 %v837, %v1020
  %v1022 = vpop.f32.mrf.mxu0
  %v1023 = vadd.f32 %v837, %v1022
  %1024 = vmatmul.bf16.gmra.mxu0 %v815
  %v1025 = vpop.f32.mrf.mxu0
  %v1026 = vadd.f32 %v837, %v1025
  %v1027 = vpop.f32.mrf.mxu0
  %v1028 = vadd.f32 %v837, %v1027
  %1029 = vmatmul.bf16.gmra.mxu0 %v816
  %v1030 = vpop.f32.mrf.mxu0
  %v1031 = vadd.f32 %v837, %v1030
  %v1032 = vpop.f32.mrf.mxu0
  %v1033 = vadd.f32 %v837, %v1032
  %1034 = vmatmul.bf16.gmra.mxu0 %v817
  %v1035 = vpop.f32.mrf.mxu0
  %v1036 = vadd.f32 %v837, %v1035
  %v1037 = vpop.f32.mrf.mxu0
  %v1038 = vadd.f32 %v837, %v1037
  %1039 = vmatmul.bf16.gmra.mxu0 %v818
  %v1040 = vpop.f32.mrf.mxu0
  %v1041 = vadd.f32 %v837, %v1040
  %v1042 = vpop.f32.mrf.mxu0
  %v1043 = vadd.f32 %v837, %v1042
  %1044 = vmatmul.bf16.gmra.mxu0 %v819
  %v1045 = vpop.f32.mrf.mxu0
  %v1046 = vadd.f32 %v837, %v1045
  %v1047 = vpop.f32.mrf.mxu0
  %v1048 = vadd.f32 %v837, %v1047
  %1049 = vmatmul.bf16.gmra.mxu0 %v820
  %v1050 = vpop.f32.mrf.mxu0
  %v1051 = vadd.f32 %v837, %v1050
  %v1052 = vpop.f32.mrf.mxu0
  %v1053 = vadd.f32 %v837, %v1052
  %1054 = vdwg.mxu0
  %v1055 = vmax.f32 %v896, 0.0
  %v1056 = vmax.f32 %v898, 0.0
  %v1057 = vmax.f32 %v901, 0.0
  %v1058 = vmax.f32 %v903, 0.0
  %v1059 = vmax.f32 %v906, 0.0
  %v1060 = vmax.f32 %v908, 0.0
  %v1061 = vmax.f32 %v911, 0.0
  %v1062 = vmax.f32 %v913, 0.0
  %v1063 = vmax.f32 %v916, 0.0
  %v1064 = vmax.f32 %v918, 0.0
  %v1065 = vmax.f32 %v921, 0.0
  %v1066 = vmax.f32 %v923, 0.0
  %v1067 = vmax.f32 %v926, 0.0
  %v1068 = vmax.f32 %v928, 0.0
  %v1069 = vmax.f32 %v931, 0.0
  %v1070 = vmax.f32 %v933, 0.0
  %v1071 = vmax.f32 %v936, 0.0
  %v1072 = vmax.f32 %v938, 0.0
  %v1073 = vmax.f32 %v941, 0.0
  %v1074 = vmax.f32 %v943, 0.0
  %v1075 = vmax.f32 %v946, 0.0
  %v1076 = vmax.f32 %v948, 0.0
  %v1077 = vmax.f32 %v951, 0.0
  %v1078 = vmax.f32 %v953, 0.0
  %v1079 = vmax.f32 %v956, 0.0
  %v1080 = vmax.f32 %v958, 0.0
  %v1081 = vmax.f32 %v961, 0.0
  %v1082 = vmax.f32 %v963, 0.0
  %v1083 = vmax.f32 %v966, 0.0
  %v1084 = vmax.f32 %v968, 0.0
  %v1085 = vmax.f32 %v971, 0.0
  %v1086 = vmax.f32 %v973, 0.0
  %v1087 = vmax.f32 %v976, 0.0
  %v1088 = vmax.f32 %v978, 0.0
  %v1089 = vmax.f32 %v981, 0.0
  %v1090 = vmax.f32 %v983, 0.0
  %v1091 = vmax.f32 %v986, 0.0
  %v1092 = vmax.f32 %v988, 0.0
  %v1093 = vmax.f32 %v991, 0.0
  %v1094 = vmax.f32 %v993, 0.0
  %v1095 = vmax.f32 %v996, 0.0
  %v1096 = vmax.f32 %v998, 0.0
  %v1097 = vmax.f32 %v1001, 0.0
  %v1098 = vmax.f32 %v1003, 0.0
  %v1099 = vmax.f32 %v1006, 0.0
  %v1100 = vmax.f32 %v1008, 0.0
  %v1101 = vmax.f32 %v1011, 0.0
  %v1102 = vmax.f32 %v1013, 0.0
  %v1103 = vmax.f32 %v1016, 0.0
  %v1104 = vmax.f32 %v1018, 0.0
  %v1105 = vmax.f32 %v1021, 0.0
  %v1106 = vmax.f32 %v1023, 0.0
  %v1107 = vmax.f32 %v1026, 0.0
  %v1108 = vmax.f32 %v1028, 0.0
  %v1109 = vmax.f32 %v1031, 0.0
  %v1110 = vmax.f32 %v1033, 0.0
  %v1111 = vmax.f32 %v1036, 0.0
  %v1112 = vmax.f32 %v1038, 0.0
  %v1113 = vmax.f32 %v1041, 0.0
  %v1114 = vmax.f32 %v1043, 0.0
  %v1115 = vmax.f32 %v1046, 0.0
  %v1116 = vmax.f32 %v1048, 0.0
  %v1117 = vmax.f32 %v1051, 0.0
  %v1118 = vmax.f32 %v1053, 0.0
  %v1119 = vpack.c.bf16 %v1056, %v1055
  %v1120 = vpack.c.bf16 %v1058, %v1057
  %v1121 = vpack.c.bf16 %v1060, %v1059
  %v1122 = vpack.c.bf16 %v1062, %v1061
  %v1123 = vpack.c.bf16 %v1064, %v1063
  %v1124 = vpack.c.bf16 %v1066, %v1065
  %v1125 = vpack.c.bf16 %v1068, %v1067
  %v1126 = vpack.c.bf16 %v1070, %v1069
  %v1127 = vpack.c.bf16 %v1072, %v1071
  %v1128 = vpack.c.bf16 %v1074, %v1073
  %v1129 = vpack.c.bf16 %v1076, %v1075
  %v1130 = vpack.c.bf16 %v1078, %v1077
  %v1131 = vpack.c.bf16 %v1080, %v1079
  %v1132 = vpack.c.bf16 %v1082, %v1081
  %v1133 = vpack.c.bf16 %v1084, %v1083
  %v1134 = vpack.c.bf16 %v1086, %v1085
  %v1135 = vpack.c.bf16 %v1088, %v1087
  %v1136 = vpack.c.bf16 %v1090, %v1089
  %v1137 = vpack.c.bf16 %v1092, %v1091
  %v1138 = vpack.c.bf16 %v1094, %v1093
  %v1139 = vpack.c.bf16 %v1096, %v1095
  %v1140 = vpack.c.bf16 %v1098, %v1097
  %v1141 = vpack.c.bf16 %v1100, %v1099
  %v1142 = vpack.c.bf16 %v1102, %v1101
  %v1143 = vpack.c.bf16 %v1104, %v1103
  %v1144 = vpack.c.bf16 %v1106, %v1105
  %v1145 = vpack.c.bf16 %v1108, %v1107
  %v1146 = vpack.c.bf16 %v1110, %v1109
  %v1147 = vpack.c.bf16 %v1112, %v1111
  %v1148 = vpack.c.bf16 %v1114, %v1113
  %v1149 = vpack.c.bf16 %v1116, %v1115
  %v1150 = vpack.c.bf16 %v1118, %v1117
  %v1151 = vld [vmem:[%s1 + $0x90] sm:$0xf]
  %v1152 = vld [vmem:[%s1 + $0x94] sm:$0xf]
  %v1153 = vld [vmem:[%s1 + $0x98] sm:$0xf]
  %v1154 = vld [vmem:[%s1 + $0x9c] sm:$0xf]
  %v1155 = vld [vmem:[%s1 + $0xa0] sm:$0xf]
  %v1156 = vld [vmem:[%s1 + $0xa4] sm:$0xf]
  %v1157 = vld [vmem:[%s1 + $0xa8] sm:$0xf]
  %v1158 = vld [vmem:[%s1 + $0xac] sm:$0xf]
  %v1159 = vld [vmem:[%s1 + $0xb0] sm:$0xf]
  %v1160 = vld [vmem:[%s1 + $0xb4] sm:$0xf]
  %v1161 = vld [vmem:[%s1 + $0xb8] sm:$0xf]
  %v1162 = vld [vmem:[%s1 + $0xbc] sm:$0xf]
  %v1163 = vld [vmem:[%s1 + $0xc0] sm:$0xf]
  %v1164 = vld [vmem:[%s1 + $0xc4] sm:$0xf]
  %v1165 = vld [vmem:[%s1 + $0xc8] sm:$0xf]
  %v1166 = vld [vmem:[%s1 + $0xcc] sm:$0xf]
  %v1167 = vperm.slane %v15, 3
  %v1184 = vunpack.c.l.b16 %v1151
  %v1185 = vunpack.c.l.b16 %v1152
  %v1186 = vunpack.c.l.b16 %v1153
  %v1187 = vunpack.c.l.b16 %v1154
  %v1188 = vunpack.c.l.b16 %v1155
  %v1189 = vunpack.c.l.b16 %v1156
  %v1190 = vunpack.c.l.b16 %v1157
  %v1191 = vunpack.c.l.b16 %v1158
  %v1192 = vunpack.c.l.b16 %v1159
  %v1193 = vunpack.c.l.b16 %v1160
  %v1194 = vunpack.c.l.b16 %v1161
  %v1195 = vunpack.c.l.b16 %v1162
  %v1196 = vunpack.c.l.b16 %v1163
  %v1197 = vunpack.c.l.b16 %v1164
  %v1198 = vunpack.c.l.b16 %v1165
  %v1199 = vunpack.c.l.b16 %v1166
  %v1200 = vpack.c.b16 %v1185, %v1184
  %v1201 = vpack.c.b16 %v1187, %v1186
  %v1202 = vpack.c.b16 %v1189, %v1188
  %v1203 = vpack.c.b16 %v1191, %v1190
  %v1204 = vpack.c.b16 %v1193, %v1192
  %v1205 = vpack.c.b16 %v1195, %v1194
  %v1206 = vpack.c.b16 %v1197, %v1196
  %v1207 = vpack.c.b16 %v1199, %v1198
  %1216 = vmatpush.bf16.msra.mxu0 %v1207
  %1217 = vmatpush.bf16.msra.mxu0 %v1206
  %1218 = vmatpush.bf16.msra.mxu0 %v1205
  %1219 = vmatpush.bf16.msra.mxu0 %v1204
  %1220 = vmatpush.bf16.msra.mxu0 %v1203
  %1221 = vmatpush.bf16.msra.mxu0 %v1202
  %1222 = vmatpush.bf16.msra.mxu0 %v1201
  %1223 = vmatpush.bf16.msra.mxu0 %v1200
  %1224 = vmatmul.bf16.gmra.mxu0 %v1119
  %v1225 = vpop.f32.mrf.mxu0
  %v1226 = vadd.f32 %v1167, %v1225
  %v1227 = vpop.f32.mrf.mxu0
  %v1228 = vadd.f32 %v1167, %v1227
  %1229 = vmatmul.bf16.gmra.mxu0 %v1120
  %v1230 = vpop.f32.mrf.mxu0
  %v1231 = vadd.f32 %v1167, %v1230
  %v1232 = vpop.f32.mrf.mxu0
  %v1233 = vadd.f32 %v1167, %v1232
  %1234 = vmatmul.bf16.gmra.mxu0 %v1121
  %v1235 = vpop.f32.mrf.mxu0
  %v1236 = vadd.f32 %v1167, %v1235
  %v1237 = vpop.f32.mrf.mxu0
  %v1238 = vadd.f32 %v1167, %v1237
  %1239 = vmatmul.bf16.gmra.mxu0 %v1122
  %v1240 = vpop.f32.mrf.mxu0
  %v1241 = vadd.f32 %v1167, %v1240
  %v1242 = vpop.f32.mrf.mxu0
  %v1243 = vadd.f32 %v1167, %v1242
  %1244 = vmatmul.bf16.gmra.mxu0 %v1123
  %v1245 = vpop.f32.mrf.mxu0
  %v1246 = vadd.f32 %v1167, %v1245
  %v1247 = vpop.f32.mrf.mxu0
  %v1248 = vadd.f32 %v1167, %v1247
  %1249 = vmatmul.bf16.gmra.mxu0 %v1124
  %v1250 = vpop.f32.mrf.mxu0
  %v1251 = vadd.f32 %v1167, %v1250
  %v1252 = vpop.f32.mrf.mxu0
  %v1253 = vadd.f32 %v1167, %v1252
  %1254 = vmatmul.bf16.gmra.mxu0 %v1125
  %v1255 = vpop.f32.mrf.mxu0
  %v1256 = vadd.f32 %v1167, %v1255
  %v1257 = vpop.f32.mrf.mxu0
  %v1258 = vadd.f32 %v1167, %v1257
  %1259 = vmatmul.bf16.gmra.mxu0 %v1126
  %v1260 = vpop.f32.mrf.mxu0
  %v1261 = vadd.f32 %v1167, %v1260
  %v1262 = vpop.f32.mrf.mxu0
  %v1263 = vadd.f32 %v1167, %v1262
  %1264 = vmatmul.bf16.gmra.mxu0 %v1127
  %v1265 = vpop.f32.mrf.mxu0
  %v1266 = vadd.f32 %v1167, %v1265
  %v1267 = vpop.f32.mrf.mxu0
  %v1268 = vadd.f32 %v1167, %v1267
  %1269 = vmatmul.bf16.gmra.mxu0 %v1128
  %v1270 = vpop.f32.mrf.mxu0
  %v1271 = vadd.f32 %v1167, %v1270
  %v1272 = vpop.f32.mrf.mxu0
  %v1273 = vadd.f32 %v1167, %v1272
  %1274 = vmatmul.bf16.gmra.mxu0 %v1129
  %v1275 = vpop.f32.mrf.mxu0
  %v1276 = vadd.f32 %v1167, %v1275
  %v1277 = vpop.f32.mrf.mxu0
  %v1278 = vadd.f32 %v1167, %v1277
  %1279 = vmatmul.bf16.gmra.mxu0 %v1130
  %v1280 = vpop.f32.mrf.mxu0
  %v1281 = vadd.f32 %v1167, %v1280
  %v1282 = vpop.f32.mrf.mxu0
  %v1283 = vadd.f32 %v1167, %v1282
  %1284 = vmatmul.bf16.gmra.mxu0 %v1131
  %v1285 = vpop.f32.mrf.mxu0
  %v1286 = vadd.f32 %v1167, %v1285
  %v1287 = vpop.f32.mrf.mxu0
  %v1288 = vadd.f32 %v1167, %v1287
  %1289 = vmatmul.bf16.gmra.mxu0 %v1132
  %v1290 = vpop.f32.mrf.mxu0
  %v1291 = vadd.f32 %v1167, %v1290
  %v1292 = vpop.f32.mrf.mxu0
  %v1293 = vadd.f32 %v1167, %v1292
  %1294 = vmatmul.bf16.gmra.mxu0 %v1133
  %v1295 = vpop.f32.mrf.mxu0
  %v1296 = vadd.f32 %v1167, %v1295
  %v1297 = vpop.f32.mrf.mxu0
  %v1298 = vadd.f32 %v1167, %v1297
  %1299 = vmatmul.bf16.gmra.mxu0 %v1134
  %v1300 = vpop.f32.mrf.mxu0
  %v1301 = vadd.f32 %v1167, %v1300
  %v1302 = vpop.f32.mrf.mxu0
  %v1303 = vadd.f32 %v1167, %v1302
  %1304 = vmatmul.bf16.gmra.mxu0 %v1135
  %v1305 = vpop.f32.mrf.mxu0
  %v1306 = vadd.f32 %v1167, %v1305
  %v1307 = vpop.f32.mrf.mxu0
  %v1308 = vadd.f32 %v1167, %v1307
  %1309 = vmatmul.bf16.gmra.mxu0 %v1136
  %v1310 = vpop.f32.mrf.mxu0
  %v1311 = vadd.f32 %v1167, %v1310
  %v1312 = vpop.f32.mrf.mxu0
  %v1313 = vadd.f32 %v1167, %v1312
  %1314 = vmatmul.bf16.gmra.mxu0 %v1137
  %v1315 = vpop.f32.mrf.mxu0
  %v1316 = vadd.f32 %v1167, %v1315
  %v1317 = vpop.f32.mrf.mxu0
  %v1318 = vadd.f32 %v1167, %v1317
  %1319 = vmatmul.bf16.gmra.mxu0 %v1138
  %v1320 = vpop.f32.mrf.mxu0
  %v1321 = vadd.f32 %v1167, %v1320
  %v1322 = vpop.f32.mrf.mxu0
  %v1323 = vadd.f32 %v1167, %v1322
  %1324 = vmatmul.bf16.gmra.mxu0 %v1139
  %v1325 = vpop.f32.mrf.mxu0
  %v1326 = vadd.f32 %v1167, %v1325
  %v1327 = vpop.f32.mrf.mxu0
  %v1328 = vadd.f32 %v1167, %v1327
  %1329 = vmatmul.bf16.gmra.mxu0 %v1140
  %v1330 = vpop.f32.mrf.mxu0
  %v1331 = vadd.f32 %v1167, %v1330
  %v1332 = vpop.f32.mrf.mxu0
  %v1333 = vadd.f32 %v1167, %v1332
  %1334 = vmatmul.bf16.gmra.mxu0 %v1141
  %v1335 = vpop.f32.mrf.mxu0
  %v1336 = vadd.f32 %v1167, %v1335
  %v1337 = vpop.f32.mrf.mxu0
  %v1338 = vadd.f32 %v1167, %v1337
  %1339 = vmatmul.bf16.gmra.mxu0 %v1142
  %v1340 = vpop.f32.mrf.mxu0
  %v1341 = vadd.f32 %v1167, %v1340
  %v1342 = vpop.f32.mrf.mxu0
  %v1343 = vadd.f32 %v1167, %v1342
  %1344 = vmatmul.bf16.gmra.mxu0 %v1143
  %v1345 = vpop.f32.mrf.mxu0
  %v1346 = vadd.f32 %v1167, %v1345
  %v1347 = vpop.f32.mrf.mxu0
  %v1348 = vadd.f32 %v1167, %v1347
  %1349 = vmatmul.bf16.gmra.mxu0 %v1144
  %v1350 = vpop.f32.mrf.mxu0
  %v1351 = vadd.f32 %v1167, %v1350
  %v1352 = vpop.f32.mrf.mxu0
  %v1353 = vadd.f32 %v1167, %v1352
  %1354 = vmatmul.bf16.gmra.mxu0 %v1145
  %v1355 = vpop.f32.mrf.mxu0
  %v1356 = vadd.f32 %v1167, %v1355
  %v1357 = vpop.f32.mrf.mxu0
  %v1358 = vadd.f32 %v1167, %v1357
  %1359 = vmatmul.bf16.gmra.mxu0 %v1146
  %v1360 = vpop.f32.mrf.mxu0
  %v1361 = vadd.f32 %v1167, %v1360
  %v1362 = vpop.f32.mrf.mxu0
  %v1363 = vadd.f32 %v1167, %v1362
  %1364 = vmatmul.bf16.gmra.mxu0 %v1147
  %v1365 = vpop.f32.mrf.mxu0
  %v1366 = vadd.f32 %v1167, %v1365
  %v1367 = vpop.f32.mrf.mxu0
  %v1368 = vadd.f32 %v1167, %v1367
  %1369 = vmatmul.bf16.gmra.mxu0 %v1148
  %v1370 = vpop.f32.mrf.mxu0
  %v1371 = vadd.f32 %v1167, %v1370
  %v1372 = vpop.f32.mrf.mxu0
  %v1373 = vadd.f32 %v1167, %v1372
  %1374 = vmatmul.bf16.gmra.mxu0 %v1149
  %v1375 = vpop.f32.mrf.mxu0
  %v1376 = vadd.f32 %v1167, %v1375
  %v1377 = vpop.f32.mrf.mxu0
  %v1378 = vadd.f32 %v1167, %v1377
  %1379 = vmatmul.bf16.gmra.mxu0 %v1150
  %v1380 = vpop.f32.mrf.mxu0
  %v1381 = vadd.f32 %v1167, %v1380
  %v1382 = vpop.f32.mrf.mxu0
  %v1383 = vadd.f32 %v1167, %v1382
  %1384 = vdwg.mxu0
  %v1385 = vmax.f32 %v1226, 0.0
  %v1386 = vmax.f32 %v1228, 0.0
  %v1387 = vmax.f32 %v1231, 0.0
  %v1388 = vmax.f32 %v1233, 0.0
  %v1389 = vmax.f32 %v1236, 0.0
  %v1390 = vmax.f32 %v1238, 0.0
  %v1391 = vmax.f32 %v1241, 0.0
  %v1392 = vmax.f32 %v1243, 0.0
  %v1393 = vmax.f32 %v1246, 0.0
  %v1394 = vmax.f32 %v1248, 0.0
  %v1395 = vmax.f32 %v1251, 0.0
  %v1396 = vmax.f32 %v1253, 0.0
  %v1397 = vmax.f32 %v1256, 0.0
  %v1398 = vmax.f32 %v1258, 0.0
  %v1399 = vmax.f32 %v1261, 0.0
  %v1400 = vmax.f32 %v1263, 0.0
  %v1401 = vmax.f32 %v1266, 0.0
  %v1402 = vmax.f32 %v1268, 0.0
  %v1403 = vmax.f32 %v1271, 0.0
  %v1404 = vmax.f32 %v1273, 0.0
  %v1405 = vmax.f32 %v1276, 0.0
  %v1406 = vmax.f32 %v1278, 0.0
  %v1407 = vmax.f32 %v1281, 0.0
  %v1408 = vmax.f32 %v1283, 0.0
  %v1409 = vmax.f32 %v1286, 0.0
  %v1410 = vmax.f32 %v1288, 0.0
  %v1411 = vmax.f32 %v1291, 0.0
  %v1412 = vmax.f32 %v1293, 0.0
  %v1413 = vmax.f32 %v1296, 0.0
  %v1414 = vmax.f32 %v1298, 0.0
  %v1415 = vmax.f32 %v1301, 0.0
  %v1416 = vmax.f32 %v1303, 0.0
  %v1417 = vmax.f32 %v1306, 0.0
  %v1418 = vmax.f32 %v1308, 0.0
  %v1419 = vmax.f32 %v1311, 0.0
  %v1420 = vmax.f32 %v1313, 0.0
  %v1421 = vmax.f32 %v1316, 0.0
  %v1422 = vmax.f32 %v1318, 0.0
  %v1423 = vmax.f32 %v1321, 0.0
  %v1424 = vmax.f32 %v1323, 0.0
  %v1425 = vmax.f32 %v1326, 0.0
  %v1426 = vmax.f32 %v1328, 0.0
  %v1427 = vmax.f32 %v1331, 0.0
  %v1428 = vmax.f32 %v1333, 0.0
  %v1429 = vmax.f32 %v1336, 0.0
  %v1430 = vmax.f32 %v1338, 0.0
  %v1431 = vmax.f32 %v1341, 0.0
  %v1432 = vmax.f32 %v1343, 0.0
  %v1433 = vmax.f32 %v1346, 0.0
  %v1434 = vmax.f32 %v1348, 0.0
  %v1435 = vmax.f32 %v1351, 0.0
  %v1436 = vmax.f32 %v1353, 0.0
  %v1437 = vmax.f32 %v1356, 0.0
  %v1438 = vmax.f32 %v1358, 0.0
  %v1439 = vmax.f32 %v1361, 0.0
  %v1440 = vmax.f32 %v1363, 0.0
  %v1441 = vmax.f32 %v1366, 0.0
  %v1442 = vmax.f32 %v1368, 0.0
  %v1443 = vmax.f32 %v1371, 0.0
  %v1444 = vmax.f32 %v1373, 0.0
  %v1445 = vmax.f32 %v1376, 0.0
  %v1446 = vmax.f32 %v1378, 0.0
  %v1447 = vmax.f32 %v1381, 0.0
  %v1448 = vmax.f32 %v1383, 0.0
  %v1449 = vpack.c.bf16 %v1386, %v1385
  %v1450 = vpack.c.bf16 %v1388, %v1387
  %v1451 = vpack.c.bf16 %v1390, %v1389
  %v1452 = vpack.c.bf16 %v1392, %v1391
  %v1453 = vpack.c.bf16 %v1394, %v1393
  %v1454 = vpack.c.bf16 %v1396, %v1395
  %v1455 = vpack.c.bf16 %v1398, %v1397
  %v1456 = vpack.c.bf16 %v1400, %v1399
  %v1457 = vpack.c.bf16 %v1402, %v1401
  %v1458 = vpack.c.bf16 %v1404, %v1403
  %v1459 = vpack.c.bf16 %v1406, %v1405
  %v1460 = vpack.c.bf16 %v1408, %v1407
  %v1461 = vpack.c.bf16 %v1410, %v1409
  %v1462 = vpack.c.bf16 %v1412, %v1411
  %v1463 = vpack.c.bf16 %v1414, %v1413
  %v1464 = vpack.c.bf16 %v1416, %v1415
  %v1465 = vpack.c.bf16 %v1418, %v1417
  %v1466 = vpack.c.bf16 %v1420, %v1419
  %v1467 = vpack.c.bf16 %v1422, %v1421
  %v1468 = vpack.c.bf16 %v1424, %v1423
  %v1469 = vpack.c.bf16 %v1426, %v1425
  %v1470 = vpack.c.bf16 %v1428, %v1427
  %v1471 = vpack.c.bf16 %v1430, %v1429
  %v1472 = vpack.c.bf16 %v1432, %v1431
  %v1473 = vpack.c.bf16 %v1434, %v1433
  %v1474 = vpack.c.bf16 %v1436, %v1435
  %v1475 = vpack.c.bf16 %v1438, %v1437
  %v1476 = vpack.c.bf16 %v1440, %v1439
  %v1477 = vpack.c.bf16 %v1442, %v1441
  %v1478 = vpack.c.bf16 %v1444, %v1443
  %v1479 = vpack.c.bf16 %v1446, %v1445
  %v1480 = vpack.c.bf16 %v1448, %v1447
  %v1481 = vld [vmem:[%s1 + $0xd0] sm:$0xf]
  %v1482 = vld [vmem:[%s1 + $0xd4] sm:$0xf]
  %v1483 = vld [vmem:[%s1 + $0xd8] sm:$0xf]
  %v1484 = vld [vmem:[%s1 + $0xdc] sm:$0xf]
  %v1485 = vld [vmem:[%s1 + $0xe0] sm:$0xf]
  %v1486 = vld [vmem:[%s1 + $0xe4] sm:$0xf]
  %v1487 = vld [vmem:[%s1 + $0xe8] sm:$0xf]
  %v1488 = vld [vmem:[%s1 + $0xec] sm:$0xf]
  %v1489 = vld [vmem:[%s1 + $0xf0] sm:$0xf]
  %v1490 = vld [vmem:[%s1 + $0xf4] sm:$0xf]
  %v1491 = vld [vmem:[%s1 + $0xf8] sm:$0xf]
  %v1492 = vld [vmem:[%s1 + $0xfc] sm:$0xf]
  %v1493 = vld [vmem:[%s1 + $0x100] sm:$0xf]
  %v1494 = vld [vmem:[%s1 + $0x104] sm:$0xf]
  %v1495 = vld [vmem:[%s1 + $0x108] sm:$0xf]
  %v1496 = vld [vmem:[%s1 + $0x10c] sm:$0xf]
  %v1497 = vperm.slane %v15, 4
  %v1514 = vunpack.c.l.b16 %v1481
  %v1515 = vunpack.c.l.b16 %v1482
  %v1516 = vunpack.c.l.b16 %v1483
  %v1517 = vunpack.c.l.b16 %v1484
  %v1518 = vunpack.c.l.b16 %v1485
  %v1519 = vunpack.c.l.b16 %v1486
  %v1520 = vunpack.c.l.b16 %v1487
  %v1521 = vunpack.c.l.b16 %v1488
  %v1522 = vunpack.c.l.b16 %v1489
  %v1523 = vunpack.c.l.b16 %v1490
  %v1524 = vunpack.c.l.b16 %v1491
  %v1525 = vunpack.c.l.b16 %v1492
  %v1526 = vunpack.c.l.b16 %v1493
  %v1527 = vunpack.c.l.b16 %v1494
  %v1528 = vunpack.c.l.b16 %v1495
  %v1529 = vunpack.c.l.b16 %v1496
  %v1530 = vpack.c.b16 %v1515, %v1514
  %v1531 = vpack.c.b16 %v1517, %v1516
  %v1532 = vpack.c.b16 %v1519, %v1518
  %v1533 = vpack.c.b16 %v1521, %v1520
  %v1534 = vpack.c.b16 %v1523, %v1522
  %v1535 = vpack.c.b16 %v1525, %v1524
  %v1536 = vpack.c.b16 %v1527, %v1526
  %v1537 = vpack.c.b16 %v1529, %v1528
  %1546 = vmatpush.bf16.msra.mxu0 %v1537
  %1547 = vmatpush.bf16.msra.mxu0 %v1536
  %1548 = vmatpush.bf16.msra.mxu0 %v1535
  %1549 = vmatpush.bf16.msra.mxu0 %v1534
  %1550 = vmatpush.bf16.msra.mxu0 %v1533
  %1551 = vmatpush.bf16.msra.mxu0 %v1532
  %1552 = vmatpush.bf16.msra.mxu0 %v1531
  %1553 = vmatpush.bf16.msra.mxu0 %v1530
  %1554 = vmatmul.bf16.gmra.mxu0 %v1449
  %v1555 = vpop.f32.mrf.mxu0
  %v1556 = vadd.f32 %v1497, %v1555
  %v1557 = vpop.f32.mrf.mxu0
  %v1558 = vadd.f32 %v1497, %v1557
  %1559 = vmatmul.bf16.gmra.mxu0 %v1450
  %v1560 = vpop.f32.mrf.mxu0
  %v1561 = vadd.f32 %v1497, %v1560
  %v1562 = vpop.f32.mrf.mxu0
  %v1563 = vadd.f32 %v1497, %v1562
  %1564 = vmatmul.bf16.gmra.mxu0 %v1451
  %v1565 = vpop.f32.mrf.mxu0
  %v1566 = vadd.f32 %v1497, %v1565
  %v1567 = vpop.f32.mrf.mxu0
  %v1568 = vadd.f32 %v1497, %v1567
  %1569 = vmatmul.bf16.gmra.mxu0 %v1452
  %v1570 = vpop.f32.mrf.mxu0
  %v1571 = vadd.f32 %v1497, %v1570
  %v1572 = vpop.f32.mrf.mxu0
  %v1573 = vadd.f32 %v1497, %v1572
  %1574 = vmatmul.bf16.gmra.mxu0 %v1453
  %v1575 = vpop.f32.mrf.mxu0
  %v1576 = vadd.f32 %v1497, %v1575
  %v1577 = vpop.f32.mrf.mxu0
  %v1578 = vadd.f32 %v1497, %v1577
  %1579 = vmatmul.bf16.gmra.mxu0 %v1454
  %v1580 = vpop.f32.mrf.mxu0
  %v1581 = vadd.f32 %v1497, %v1580
  %v1582 = vpop.f32.mrf.mxu0
  %v1583 = vadd.f32 %v1497, %v1582
  %1584 = vmatmul.bf16.gmra.mxu0 %v1455
  %v1585 = vpop.f32.mrf.mxu0
  %v1586 = vadd.f32 %v1497, %v1585
  %v1587 = vpop.f32.mrf.mxu0
  %v1588 = vadd.f32 %v1497, %v1587
  %1589 = vmatmul.bf16.gmra.mxu0 %v1456
  %v1590 = vpop.f32.mrf.mxu0
  %v1591 = vadd.f32 %v1497, %v1590
  %v1592 = vpop.f32.mrf.mxu0
  %v1593 = vadd.f32 %v1497, %v1592
  %1594 = vmatmul.bf16.gmra.mxu0 %v1457
  %v1595 = vpop.f32.mrf.mxu0
  %v1596 = vadd.f32 %v1497, %v1595
  %v1597 = vpop.f32.mrf.mxu0
  %v1598 = vadd.f32 %v1497, %v1597
  %1599 = vmatmul.bf16.gmra.mxu0 %v1458
  %v1600 = vpop.f32.mrf.mxu0
  %v1601 = vadd.f32 %v1497, %v1600
  %v1602 = vpop.f32.mrf.mxu0
  %v1603 = vadd.f32 %v1497, %v1602
  %1604 = vmatmul.bf16.gmra.mxu0 %v1459
  %v1605 = vpop.f32.mrf.mxu0
  %v1606 = vadd.f32 %v1497, %v1605
  %v1607 = vpop.f32.mrf.mxu0
  %v1608 = vadd.f32 %v1497, %v1607
  %1609 = vmatmul.bf16.gmra.mxu0 %v1460
  %v1610 = vpop.f32.mrf.mxu0
  %v1611 = vadd.f32 %v1497, %v1610
  %v1612 = vpop.f32.mrf.mxu0
  %v1613 = vadd.f32 %v1497, %v1612
  %1614 = vmatmul.bf16.gmra.mxu0 %v1461
  %v1615 = vpop.f32.mrf.mxu0
  %v1616 = vadd.f32 %v1497, %v1615
  %v1617 = vpop.f32.mrf.mxu0
  %v1618 = vadd.f32 %v1497, %v1617
  %1619 = vmatmul.bf16.gmra.mxu0 %v1462
  %v1620 = vpop.f32.mrf.mxu0
  %v1621 = vadd.f32 %v1497, %v1620
  %v1622 = vpop.f32.mrf.mxu0
  %v1623 = vadd.f32 %v1497, %v1622
  %1624 = vmatmul.bf16.gmra.mxu0 %v1463
  %v1625 = vpop.f32.mrf.mxu0
  %v1626 = vadd.f32 %v1497, %v1625
  %v1627 = vpop.f32.mrf.mxu0
  %v1628 = vadd.f32 %v1497, %v1627
  %1629 = vmatmul.bf16.gmra.mxu0 %v1464
  %v1630 = vpop.f32.mrf.mxu0
  %v1631 = vadd.f32 %v1497, %v1630
  %v1632 = vpop.f32.mrf.mxu0
  %v1633 = vadd.f32 %v1497, %v1632
  %1634 = vmatmul.bf16.gmra.mxu0 %v1465
  %v1635 = vpop.f32.mrf.mxu0
  %v1636 = vadd.f32 %v1497, %v1635
  %v1637 = vpop.f32.mrf.mxu0
  %v1638 = vadd.f32 %v1497, %v1637
  %1639 = vmatmul.bf16.gmra.mxu0 %v1466
  %v1640 = vpop.f32.mrf.mxu0
  %v1641 = vadd.f32 %v1497, %v1640
  %v1642 = vpop.f32.mrf.mxu0
  %v1643 = vadd.f32 %v1497, %v1642
  %1644 = vmatmul.bf16.gmra.mxu0 %v1467
  %v1645 = vpop.f32.mrf.mxu0
  %v1646 = vadd.f32 %v1497, %v1645
  %v1647 = vpop.f32.mrf.mxu0
  %v1648 = vadd.f32 %v1497, %v1647
  %1649 = vmatmul.bf16.gmra.mxu0 %v1468
  %v1650 = vpop.f32.mrf.mxu0
  %v1651 = vadd.f32 %v1497, %v1650
  %v1652 = vpop.f32.mrf.mxu0
  %v1653 = vadd.f32 %v1497, %v1652
  %1654 = vmatmul.bf16.gmra.mxu0 %v1469
  %v1655 = vpop.f32.mrf.mxu0
  %v1656 = vadd.f32 %v1497, %v1655
  %v1657 = vpop.f32.mrf.mxu0
  %v1658 = vadd.f32 %v1497, %v1657
  %1659 = vmatmul.bf16.gmra.mxu0 %v1470
  %v1660 = vpop.f32.mrf.mxu0
  %v1661 = vadd.f32 %v1497, %v1660
  %v1662 = vpop.f32.mrf.mxu0
  %v1663 = vadd.f32 %v1497, %v1662
  %1664 = vmatmul.bf16.gmra.mxu0 %v1471
  %v1665 = vpop.f32.mrf.mxu0
  %v1666 = vadd.f32 %v1497, %v1665
  %v1667 = vpop.f32.mrf.mxu0
  %v1668 = vadd.f32 %v1497, %v1667
  %1669 = vmatmul.bf16.gmra.mxu0 %v1472
  %v1670 = vpop.f32.mrf.mxu0
  %v1671 = vadd.f32 %v1497, %v1670
  %v1672 = vpop.f32.mrf.mxu0
  %v1673 = vadd.f32 %v1497, %v1672
  %1674 = vmatmul.bf16.gmra.mxu0 %v1473
  %v1675 = vpop.f32.mrf.mxu0
  %v1676 = vadd.f32 %v1497, %v1675
  %v1677 = vpop.f32.mrf.mxu0
  %v1678 = vadd.f32 %v1497, %v1677
  %1679 = vmatmul.bf16.gmra.mxu0 %v1474
  %v1680 = vpop.f32.mrf.mxu0
  %v1681 = vadd.f32 %v1497, %v1680
  %v1682 = vpop.f32.mrf.mxu0
  %v1683 = vadd.f32 %v1497, %v1682
  %1684 = vmatmul.bf16.gmra.mxu0 %v1475
  %v1685 = vpop.f32.mrf.mxu0
  %v1686 = vadd.f32 %v1497, %v1685
  %v1687 = vpop.f32.mrf.mxu0
  %v1688 = vadd.f32 %v1497, %v1687
  %1689 = vmatmul.bf16.gmra.mxu0 %v1476
  %v1690 = vpop.f32.mrf.mxu0
  %v1691 = vadd.f32 %v1497, %v1690
  %v1692 = vpop.f32.mrf.mxu0
  %v1693 = vadd.f32 %v1497, %v1692
  %1694 = vmatmul.bf16.gmra.mxu0 %v1477
  %v1695 = vpop.f32.mrf.mxu0
  %v1696 = vadd.f32 %v1497, %v1695
  %v1697 = vpop.f32.mrf.mxu0
  %v1698 = vadd.f32 %v1497, %v1697
  %1699 = vmatmul.bf16.gmra.mxu0 %v1478
  %v1700 = vpop.f32.mrf.mxu0
  %v1701 = vadd.f32 %v1497, %v1700
  %v1702 = vpop.f32.mrf.mxu0
  %v1703 = vadd.f32 %v1497, %v1702
  %1704 = vmatmul.bf16.gmra.mxu0 %v1479
  %v1705 = vpop.f32.mrf.mxu0
  %v1706 = vadd.f32 %v1497, %v1705
  %v1707 = vpop.f32.mrf.mxu0
  %v1708 = vadd.f32 %v1497, %v1707
  %1709 = vmatmul.bf16.gmra.mxu0 %v1480
  %v1710 = vpop.f32.mrf.mxu0
  %v1711 = vadd.f32 %v1497, %v1710
  %v1712 = vpop.f32.mrf.mxu0
  %v1713 = vadd.f32 %v1497, %v1712
  %1714 = vdwg.mxu0
  %1715 = vst [vmem:[%s3] sm:$0xff] %v1556
  %1716 = vst [vmem:[%s3 + $0x8] sm:$0xff] %v1558
  %1717 = vst [vmem:[%s3 + $0x10] sm:$0xff] %v1561
  %1718 = vst [vmem:[%s3 + $0x18] sm:$0xff] %v1563
  %1719 = vst [vmem:[%s3 + $0x20] sm:$0xff] %v1566
  %1720 = vst [vmem:[%s3 + $0x28] sm:$0xff] %v1568
  %1721 = vst [vmem:[%s3 + $0x30] sm:$0xff] %v1571
  %1722 = vst [vmem:[%s3 + $0x38] sm:$0xff] %v1573
  %1723 = vst [vmem:[%s3 + $0x40] sm:$0xff] %v1576
  %1724 = vst [vmem:[%s3 + $0x48] sm:$0xff] %v1578
  %1725 = vst [vmem:[%s3 + $0x50] sm:$0xff] %v1581
  %1726 = vst [vmem:[%s3 + $0x58] sm:$0xff] %v1583
  %1727 = vst [vmem:[%s3 + $0x60] sm:$0xff] %v1586
  %1728 = vst [vmem:[%s3 + $0x68] sm:$0xff] %v1588
  %1729 = vst [vmem:[%s3 + $0x70] sm:$0xff] %v1591
  %1730 = vst [vmem:[%s3 + $0x78] sm:$0xff] %v1593
  %1731 = vst [vmem:[%s3 + $0x80] sm:$0xff] %v1596
  %1732 = vst [vmem:[%s3 + $0x88] sm:$0xff] %v1598
  %1733 = vst [vmem:[%s3 + $0x90] sm:$0xff] %v1601
  %1734 = vst [vmem:[%s3 + $0x98] sm:$0xff] %v1603
  %1735 = vst [vmem:[%s3 + $0xa0] sm:$0xff] %v1606
  %1736 = vst [vmem:[%s3 + $0xa8] sm:$0xff] %v1608
  %1737 = vst [vmem:[%s3 + $0xb0] sm:$0xff] %v1611
  %1738 = vst [vmem:[%s3 + $0xb8] sm:$0xff] %v1613
  %1739 = vst [vmem:[%s3 + $0xc0] sm:$0xff] %v1616
  %1740 = vst [vmem:[%s3 + $0xc8] sm:$0xff] %v1618
  %1741 = vst [vmem:[%s3 + $0xd0] sm:$0xff] %v1621
  %1742 = vst [vmem:[%s3 + $0xd8] sm:$0xff] %v1623
  %1743 = vst [vmem:[%s3 + $0xe0] sm:$0xff] %v1626
  %1744 = vst [vmem:[%s3 + $0xe8] sm:$0xff] %v1628
  %1745 = vst [vmem:[%s3 + $0xf0] sm:$0xff] %v1631
  %1746 = vst [vmem:[%s3 + $0xf8] sm:$0xff] %v1633
  %1747 = vst [vmem:[%s3 + $0x100] sm:$0xff] %v1636
  %1748 = vst [vmem:[%s3 + $0x108] sm:$0xff] %v1638
  %1749 = vst [vmem:[%s3 + $0x110] sm:$0xff] %v1641
  %1750 = vst [vmem:[%s3 + $0x118] sm:$0xff] %v1643
  %1751 = vst [vmem:[%s3 + $0x120] sm:$0xff] %v1646
  %1752 = vst [vmem:[%s3 + $0x128] sm:$0xff] %v1648
  %1753 = vst [vmem:[%s3 + $0x130] sm:$0xff] %v1651
  %1754 = vst [vmem:[%s3 + $0x138] sm:$0xff] %v1653
  %1755 = vst [vmem:[%s3 + $0x140] sm:$0xff] %v1656
  %1756 = vst [vmem:[%s3 + $0x148] sm:$0xff] %v1658
  %1757 = vst [vmem:[%s3 + $0x150] sm:$0xff] %v1661
  %1758 = vst [vmem:[%s3 + $0x158] sm:$0xff] %v1663
  %1759 = vst [vmem:[%s3 + $0x160] sm:$0xff] %v1666
  %1760 = vst [vmem:[%s3 + $0x168] sm:$0xff] %v1668
  %1761 = vst [vmem:[%s3 + $0x170] sm:$0xff] %v1671
  %1762 = vst [vmem:[%s3 + $0x178] sm:$0xff] %v1673
  %1763 = vst [vmem:[%s3 + $0x180] sm:$0xff] %v1676
  %1764 = vst [vmem:[%s3 + $0x188] sm:$0xff] %v1678
  %1765 = vst [vmem:[%s3 + $0x190] sm:$0xff] %v1681
  %1766 = vst [vmem:[%s3 + $0x198] sm:$0xff] %v1683
  %1767 = vst [vmem:[%s3 + $0x1a0] sm:$0xff] %v1686
  %1768 = vst [vmem:[%s3 + $0x1a8] sm:$0xff] %v1688
  %1769 = vst [vmem:[%s3 + $0x1b0] sm:$0xff] %v1691
  %1770 = vst [vmem:[%s3 + $0x1b8] sm:$0xff] %v1693
  %1771 = vst [vmem:[%s3 + $0x1c0] sm:$0xff] %v1696
  %1772 = vst [vmem:[%s3 + $0x1c8] sm:$0xff] %v1698
  %1773 = vst [vmem:[%s3 + $0x1d0] sm:$0xff] %v1701
  %1774 = vst [vmem:[%s3 + $0x1d8] sm:$0xff] %v1703
  %1775 = vst [vmem:[%s3 + $0x1e0] sm:$0xff] %v1706
  %1776 = vst [vmem:[%s3 + $0x1e8] sm:$0xff] %v1708
  %1777 = vst [vmem:[%s3 + $0x1f0] sm:$0xff] %v1711
  %1778 = vst [vmem:[%s3 + $0x1f8] sm:$0xff] %v1713
  // Predicated region
  $region14: #{qnet_forward.1} parent=0 // pred_check
    _
  $region15: #{qnet_forward.1} parent=0 // pred_check_branch
    %1780 = sbr.rel (0) target = $region17
  $region16: #{qnet_forward.1} parent=0 // pred_region
    _
  $region17: #{qnet_forward.1} parent=0 // pred_fallthru
    _
  // Predicated region
  $region18: #{qnet_forward.1} parent=0 // pred_check
    _
  $region19: #{qnet_forward.1} parent=0 // pred_check_branch
    %1782 = sbr.rel (0) target = $region21
  $region20: #{qnet_forward.1} parent=0 // pred_region
    _
  $region21: #{qnet_forward.1} parent=0 // pred_fallthru
    _

</llo_original>
